<compile_context>
chip_gen: v6e
topology: v6e:2x2x1
jax: 0.10.0
libtpu: 0.0.40
codegen_flags: <defaults>
</compile_context>

<pallas_src>
import functools

import jax
import jax.numpy as jnp
from jax import lax
from jax.experimental import pallas as pl
from jax.experimental.pallas import tpu as pltpu


def _round_up(v, m):
    return ((v + m - 1) // m) * m


def _vmem_capacity_bytes():
    """Physical per-core VMEM; conservative v7x-sized (64 MiB) fallback."""
    try:
        cap = int(getattr(pltpu.get_tpu_info(), "vmem_capacity_bytes", 0))
        if cap > 0:
            return cap
    except Exception:
        pass
    return 64 * 1024 * 1024


def _spatial_attention_kernel(x_ref, t_ref, r_ref, bias_ref, o_ref,
                              sum_ref, max_ref, s2_ref, stack_ref, *,
                              n_channels, height, width, mask_tail):
    c_idx = pl.program_id(1)

    # ---- Streaming channel reduction (every grid step) ----------------------
    x = x_ref[0]                                      # (c_tile, H*W), lane-dense
    if mask_tail:                                     # static: only if C % c_tile
        c_tile = x.shape[0]
        chan = c_idx * c_tile + lax.broadcasted_iota(jnp.int32, x.shape, 0)
        valid = chan < n_channels
        x_sum_in = jnp.where(valid, x, jnp.zeros((), x.dtype))
        x_max_in = jnp.where(valid, x, jnp.full((), -jnp.inf, x.dtype))
    else:
        x_sum_in = x
        x_max_in = x

    part_sum = jnp.sum(x_sum_in, axis=0, keepdims=True, dtype=jnp.float32)
    part_max = jnp.max(x_max_in, axis=0, keepdims=True).astype(jnp.float32)

    @pl.when(c_idx == 0)
    def _init():
        sum_ref[...] = part_sum
        max_ref[...] = part_max

    @pl.when(c_idx > 0)
    def _accumulate():
        sum_ref[...] = sum_ref[...] + part_sum
        max_ref[...] = jnp.maximum(max_ref[...], part_max)

    # ---- Finalize: 7x7 same-conv on [avg | max] via MXU, then sigmoid -------
    @pl.when(c_idx == pl.num_programs(1) - 1)
    def _finalize():
        inv_c = 1.0 / n_channels
        # Unflatten the two (1, H*W) accumulators into one (H, 2W) image
        # [avg | max] with static row copies (no in-kernel reshape needed).
        for i in range(height):
            s2_ref[i, 0:width] = sum_ref[0, i * width:(i + 1) * width] * inv_c
            s2_ref[i, width:2 * width] = max_ref[0, i * width:(i + 1) * width]

        s2 = s2_ref[...]                              # (H, 2W) f32
        # Width-direction conv: 7 matmuls with contraction dim 2W.
        for ky in range(7):
            stack_ref[ky * height:(ky + 1) * height, :] = jnp.dot(
                s2, t_ref[ky], preferred_element_type=jnp.float32)

        # Height-direction shift + sum over ky: one matmul, contraction dim 7H.
        acc = jnp.dot(r_ref[...], stack_ref[...],
                      preferred_element_type=jnp.float32)          # (H, W)
        logits = acc + bias_ref[0, 0]                              # SMEM scalar
        attn = pl.reciprocal(1.0 + jnp.exp(-logits), approx=True)  # sigmoid

        # Lane-dense flat store of the (1, 1, H*W) output block.
        for i in range(height):
            o_ref[0, 0, i * width:(i + 1) * width] = (
                attn[i, :].astype(o_ref.dtype))


def _build_conv_operators(conv_w, height, width):
    """Bake the 7x7 conv weights into matmul operators.

    conv_w: PyTorch-layout weight (1, 2, 7, 7).
      ([avg|mx] @ t_stack[ky])[i, j] == sum_c sum_kx w[c,ky,kx]*s[c, i, j+kx-3]
      (r_cat @ vstack_ky(inner_ky))[i, j] == sum_ky inner_ky[i+ky-3, j]
    both zero-padded at the borders.
    """
    w = jnp.asarray(conv_w, jnp.float32).reshape(2, 7, 7)

    # Column (width) Toeplitz, both channels stacked: (7, 2W, W).
    b_idx = jnp.arange(width)[:, None]
    j_idx = jnp.arange(width)[None, :]
    kx = b_idx - j_idx + 3                                           # (W, W)
    valid = (kx >= 0) & (kx < 7)
    t = jnp.where(valid[None, None], w[:, :, jnp.clip(kx, 0, 6)], 0.0)  # (2,7,W,W)
    t_stack = jnp.concatenate([t[0], t[1]], axis=1)                  # (7, 2W, W)

    # Row (height) shift operator, concatenated over ky: (H, 7H).
    i_idx = jnp.arange(height)[:, None]
    a_idx = jnp.arange(height)[None, :]
    ky_idx = jnp.arange(7)[:, None, None]
    r = (a_idx[None] == i_idx[None] + ky_idx - 3).astype(jnp.float32)   # (7,H,H)
    r_cat = jnp.transpose(r, (1, 0, 2)).reshape(height, 7 * height)     # (H,7H)
    return r_cat, t_stack


def spatial_attention(x, conv_w, conv_b, *, c_tile=None):
    """x: (B, C, H, W) NCHW.  conv_w: (1, 2, 7, 7), conv_b: (1,).  -> (B, 1, H, W)."""
    B, C, H, W = x.shape
    hw = H * W
    itemsize = x.dtype.itemsize
    pack = max(8, 32 // itemsize)            # sublane packing multiple (f32:8, bf16:16)
    hw_pad = _round_up(hw, 128)

    vmem_cap = _vmem_capacity_bytes()

    # Channel tile sized against the padded VMEM footprint of one slab buffer
    # (~22% of physical VMEM per buffer; two pipeline buffers total).
    if c_tile is None:
        slab_budget = int(vmem_cap * 0.22)
        c_tile = max(1, slab_budget // (hw_pad * itemsize))
    if c_tile >= C:
        c_tile = C
    else:
        c_tile = min(C, max(pack, _round_up(c_tile, pack)))
    num_c = pl.cdiv(C, c_tile)
    mask_tail = (C % c_tile) != 0

    # Explicit scoped-VMEM budget from the real (padded) footprint.
    x_slab_bytes = _round_up(c_tile, pack) * hw_pad * itemsize
    t_bytes = 7 * _round_up(2 * W, 8) * _round_up(W, 128) * 4
    r_bytes = _round_up(H, 8) * _round_up(7 * H, 128) * 4
    o_bytes = 8 * hw_pad * itemsize
    scratch_bytes = (2 * 8 * hw_pad
                     + _round_up(H, 8) * _round_up(2 * W, 128)
                     + _round_up(7 * H, 8) * _round_up(W, 128)) * 4
    footprint = 2 * (x_slab_bytes + t_bytes + r_bytes + o_bytes) + scratch_bytes
    vmem_limit = max(32 << 20, footprint + (4 << 20))
    vmem_limit = min(vmem_limit, int(vmem_cap * 0.9))
    vmem_limit = max(vmem_limit, footprint + (2 << 20))

    r_cat, t_stack = _build_conv_operators(conv_w, H, W)
    bias2d = jnp.asarray(conv_b, jnp.float32).reshape(1, 1)
    x_flat = x.reshape(B, C, hw)

    kernel = functools.partial(_spatial_attention_kernel,
                               n_channels=C, height=H, width=W,
                               mask_tail=mask_tail)

    out = pl.pallas_call(
        kernel,
        out_shape=jax.ShapeDtypeStruct((B, 1, hw), x.dtype),
        grid_spec=pltpu.PrefetchScalarGridSpec(
            num_scalar_prefetch=0,
            grid=(B, num_c),
            in_specs=[
                pl.BlockSpec((1, c_tile, hw), lambda b, c: (b, c, 0)),   # x slab
                pl.BlockSpec((7, 2 * W, W), lambda b, c: (0, 0, 0)),     # T_stack
                pl.BlockSpec((H, 7 * H), lambda b, c: (0, 0)),           # R_cat
                pl.BlockSpec(memory_space=pltpu.MemorySpace.SMEM),       # bias
            ],
            out_specs=pl.BlockSpec((1, 1, hw), lambda b, c: (b, 0, 0)),
            scratch_shapes=[
                pltpu.VMEM((1, hw), jnp.float32),        # running channel-sum
                pltpu.VMEM((1, hw), jnp.float32),        # running channel-max
                pltpu.VMEM((H, 2 * W), jnp.float32),     # [avg | max] image
                pltpu.VMEM((7 * H, W), jnp.float32),     # stacked inner products
            ],
        ),
        compiler_params=pltpu.CompilerParams(
            dimension_semantics=("parallel", "arbitrary"),
            vmem_limit_bytes=int(vmem_limit)),
    )(x_flat, t_stack, r_cat, bias2d)

    return out.reshape(B, 1, H, W)


def _reference(x, conv_w, conv_b):
    xf = x.astype(jnp.float32)
    avg = jnp.mean(xf, axis=1, keepdims=True)
    mx = jnp.max(xf, axis=1, keepdims=True)
    s = jnp.concatenate([avg, mx], axis=1)                 # (B, 2, H, W)
    out = lax.conv_general_dilated(
        s, jnp.asarray(conv_w, jnp.float32),
        window_strides=(1, 1), padding=((3, 3), (3, 3)),
        dimension_numbers=("NCHW", "OIHW", "NCHW"),
        precision=lax.Precision.HIGHEST)
    return jax.nn.sigmoid(out + jnp.asarray(conv_b, jnp.float32).reshape(1, 1, 1, 1))


if __name__ == "__main__":
    key = jax.random.PRNGKey(0)
    kx1, kx2, kw, kb = jax.random.split(key, 4)

    conv_w = jax.random.normal(kw, (1, 2, 7, 7), dtype=jnp.float32) * 0.1
    conv_b = jax.random.normal(kb, (1,), dtype=jnp.float32) * 0.1

    # Case 1: auto-sized channel tile (single reduction step at this size).
    B, C, H, W = 2, 32, 16, 16
    x = jax.random.normal(kx1, (B, C, H, W), dtype=jnp.float32)
    ref = _reference(x, conv_w, conv_b)

    out = jax.block_until_ready(spatial_attention(x, conv_w, conv_b))
    assert out.shape == (B, 1, H, W)
    assert jnp.allclose(out, ref, atol=2e-3, rtol=2e-3), (
        f"case1 max abs err {jnp.max(jnp.abs(out - ref))}")

    # Case 2: multi-step channel reduction (grid (B, 4)).
    out2 = jax.block_until_ready(spatial_attention(x, conv_w, conv_b, c_tile=8))
    assert jnp.allclose(out2, ref, atol=2e-3, rtol=2e-3), (
        f"case2 max abs err {jnp.max(jnp.abs(out2 - ref))}")

    # Case 3: C not divisible by the tile -> masked tail tile (36 = 16+16+4).
    C3 = 36
    x3 = jax.random.normal(kx2, (B, C3, H, W), dtype=jnp.float32)
    ref3 = _reference(x3, conv_w, conv_b)
    out3 = jax.block_until_ready(spatial_attention(x3, conv_w, conv_b, c_tile=16))
    assert jnp.allclose(out3, ref3, atol=2e-3, rtol=2e-3), (
        f"case3 max abs err {jnp.max(jnp.abs(out3 - ref3))}")

    print("KERNEL_OK")
</pallas_src>

<mosaic_0001>
module attributes {stable_mosaic.version = 11 : i64} {
  func.func @_spatial_attention_kernel(%arg0: i32, %arg1: i32, %arg2: memref<1x32x256xf32, #tpu.memory_space<vmem>>, %arg3: memref<7x32x16xf32, #tpu.memory_space<vmem>>, %arg4: memref<16x112xf32, #tpu.memory_space<vmem>>, %arg5: memref<1x1xf32, #tpu.memory_space<smem>>, %arg6: memref<1x1x256xf32, #tpu.memory_space<vmem>>, %arg7: memref<1x256xf32, #tpu.memory_space<vmem>>, %arg8: memref<1x256xf32, #tpu.memory_space<vmem>>, %arg9: memref<16x32xf32, #tpu.memory_space<vmem>>, %arg10: memref<112x16xf32, #tpu.memory_space<vmem>>) attributes {dimension_semantics = [#tpu.dimension_semantics<parallel>, #tpu.dimension_semantics<arbitrary>], iteration_bounds = array<i64: 2, 1>, scalar_prefetch = 0 : i64, scratch_operands = 4 : i64, tpu.core_type = #tpu.core_type<tc>, window_params = [{transform_indices = @transform_0, window_bounds = array<i64: 1, 32, 256>}, {pipeline_mode = #tpu.pipeline_mode<synchronous>, transform_indices = @transform_1, window_bounds = array<i64: 7, 32, 16>}, {pipeline_mode = #tpu.pipeline_mode<synchronous>, transform_indices = @transform_2, window_bounds = array<i64: 16, 112>}, {transform_indices = @transform_3, window_bounds = array<i64: 1, 1>}, {transform_indices = @transform_4, window_bounds = array<i64: 1, 1, 256>}]} {
    %c0 = arith.constant 0 : index
    %c0_0 = arith.constant 0 : index
    %c0_1 = arith.constant 0 : index
    %0 = vector.load %arg2[%c0, %c0_0, %c0_1] : memref<1x32x256xf32, #tpu.memory_space<vmem>>, vector<1x32x256xf32>
    %1 = vector.shape_cast %0 : vector<1x32x256xf32> to vector<32x256xf32>
    %cst = arith.constant dense<0.000000e+00> : vector<256xf32>
    %2 = vector.multi_reduction <add>, %1, %cst [0] : vector<32x256xf32> to vector<256xf32>
    %3 = vector.shape_cast %2 : vector<256xf32> to vector<1x256xf32>
    %cst_2 = arith.constant dense<0xFF800000> : vector<256xf32>
    %4 = vector.multi_reduction <maximumf>, %1, %cst_2 [0] : vector<32x256xf32> to vector<256xf32>
    %5 = vector.shape_cast %4 : vector<256xf32> to vector<1x256xf32>
    %c0_i32 = arith.constant 0 : i32
    %6 = arith.cmpi eq, %arg1, %c0_i32 : i32
    %7 = arith.extui %6 : i1 to i32
    %c0_i32_3 = arith.constant 0 : i32
    %8 = arith.cmpi ne, %7, %c0_i32_3 : i32
    scf.if %8 {
      %c0_8 = arith.constant 0 : index
      %c0_9 = arith.constant 0 : index
      %15 = vector.load %arg7[%c0_8, %c0_9] : memref<1x256xf32, #tpu.memory_space<vmem>>, vector<1x256xf32>
      tpu.vector_store %arg7[%c0_8, %c0_9], %3 {strides = array<i32>} : memref<1x256xf32, #tpu.memory_space<vmem>>, vector<1x256xf32>,
      %c0_10 = arith.constant 0 : index
      %c0_11 = arith.constant 0 : index
      %16 = vector.load %arg8[%c0_10, %c0_11] : memref<1x256xf32, #tpu.memory_space<vmem>>, vector<1x256xf32>
      tpu.vector_store %arg8[%c0_10, %c0_11], %5 {strides = array<i32>} : memref<1x256xf32, #tpu.memory_space<vmem>>, vector<1x256xf32>,
    } else {
    }
    %c0_i32_4 = arith.constant 0 : i32
    %9 = arith.cmpi sgt, %arg1, %c0_i32_4 : i32
    %10 = arith.extui %9 : i1 to i32
    %c0_i32_5 = arith.constant 0 : i32
    %11 = arith.cmpi ne, %10, %c0_i32_5 : i32
    scf.if %11 {
      %c0_8 = arith.constant 0 : index
      %c0_9 = arith.constant 0 : index
      %15 = vector.load %arg7[%c0_8, %c0_9] : memref<1x256xf32, #tpu.memory_space<vmem>>, vector<1x256xf32>
      %16 = arith.addf %15, %3 : vector<1x256xf32>
      %c0_10 = arith.constant 0 : index
      %c0_11 = arith.constant 0 : index
      %17 = vector.load %arg7[%c0_10, %c0_11] : memref<1x256xf32, #tpu.memory_space<vmem>>, vector<1x256xf32>
      tpu.vector_store %arg7[%c0_10, %c0_11], %16 {strides = array<i32>} : memref<1x256xf32, #tpu.memory_space<vmem>>, vector<1x256xf32>,
      %c0_12 = arith.constant 0 : index
      %c0_13 = arith.constant 0 : index
      %18 = vector.load %arg8[%c0_12, %c0_13] : memref<1x256xf32, #tpu.memory_space<vmem>>, vector<1x256xf32>
      %19 = arith.maximumf %18, %5 : vector<1x256xf32>
      %c0_14 = arith.constant 0 : index
      %c0_15 = arith.constant 0 : index
      %20 = vector.load %arg8[%c0_14, %c0_15] : memref<1x256xf32, #tpu.memory_space<vmem>>, vector<1x256xf32>
      tpu.vector_store %arg8[%c0_14, %c0_15], %19 {strides = array<i32>} : memref<1x256xf32, #tpu.memory_space<vmem>>, vector<1x256xf32>,
    } else {
    }
    %c0_i32_6 = arith.constant 0 : i32
    %12 = arith.cmpi eq, %arg1, %c0_i32_6 : i32
    %13 = arith.extui %12 : i1 to i32
    %c0_i32_7 = arith.constant 0 : i32
    %14 = arith.cmpi ne, %13, %c0_i32_7 : i32
    scf.if %14 {
      %c0_8 = arith.constant 0 : index
      %c0_9 = arith.constant 0 : index
      %15 = vector.load %arg7[%c0_8, %c0_9] : memref<1x256xf32, #tpu.memory_space<vmem>>, vector<1x16xf32>
      %16 = vector.shape_cast %15 : vector<1x16xf32> to vector<16xf32>
      %cst_10 = arith.constant 3.125000e-02 : f32
      %17 = vector.broadcast %cst_10 : f32 to vector<16xf32>
      %18 = arith.mulf %16, %17 : vector<16xf32>
      %c0_11 = arith.constant 0 : index
      %c0_12 = arith.constant 0 : index
      %19 = vector.load %arg9[%c0_11, %c0_12] : memref<16x32xf32, #tpu.memory_space<vmem>>, vector<1x16xf32>
      %20 = vector.shape_cast %19 : vector<1x16xf32> to vector<16xf32>
      %21 = vector.shape_cast %18 : vector<16xf32> to vector<1x16xf32>
      tpu.vector_store %arg9[%c0_11, %c0_12], %21 {strides = array<i32>} : memref<16x32xf32, #tpu.memory_space<vmem>>, vector<1x16xf32>,
      %c0_13 = arith.constant 0 : index
      %c0_14 = arith.constant 0 : index
      %22 = vector.load %arg8[%c0_13, %c0_14] : memref<1x256xf32, #tpu.memory_space<vmem>>, vector<1x16xf32>
      %23 = vector.shape_cast %22 : vector<1x16xf32> to vector<16xf32>
      %c0_15 = arith.constant 0 : index
      %c16 = arith.constant 16 : index
      %24 = vector.load %arg9[%c0_15, %c16] : memref<16x32xf32, #tpu.memory_space<vmem>>, vector<1x16xf32>
      %25 = vector.shape_cast %24 : vector<1x16xf32> to vector<16xf32>
      %26 = vector.shape_cast %23 : vector<16xf32> to vector<1x16xf32>
      tpu.vector_store %arg9[%c0_15, %c16], %26 {strides = array<i32>} : memref<16x32xf32, #tpu.memory_space<vmem>>, vector<1x16xf32>,
      %c0_16 = arith.constant 0 : index
      %c16_17 = arith.constant 16 : index
      %27 = vector.load %arg7[%c0_16, %c16_17] : memref<1x256xf32, #tpu.memory_space<vmem>>, vector<1x16xf32>
      %28 = vector.shape_cast %27 : vector<1x16xf32> to vector<16xf32>
      %cst_18 = arith.constant 3.125000e-02 : f32
      %29 = vector.broadcast %cst_18 : f32 to vector<16xf32>
      %30 = arith.mulf %28, %29 : vector<16xf32>
      %c1 = arith.constant 1 : index
      %c0_19 = arith.constant 0 : index
      %31 = vector.load %arg9[%c1, %c0_19] : memref<16x32xf32, #tpu.memory_space<vmem>>, vector<1x16xf32>
      %32 = vector.shape_cast %31 : vector<1x16xf32> to vector<16xf32>
      %33 = vector.shape_cast %30 : vector<16xf32> to vector<1x16xf32>
      tpu.vector_store %arg9[%c1, %c0_19], %33 {strides = array<i32>} : memref<16x32xf32, #tpu.memory_space<vmem>>, vector<1x16xf32>,
      %c0_20 = arith.constant 0 : index
      %c16_21 = arith.constant 16 : index
      %34 = vector.load %arg8[%c0_20, %c16_21] : memref<1x256xf32, #tpu.memory_space<vmem>>, vector<1x16xf32>
      %35 = vector.shape_cast %34 : vector<1x16xf32> to vector<16xf32>
      %c1_22 = arith.constant 1 : index
      %c16_23 = arith.constant 16 : index
      %36 = vector.load %arg9[%c1_22, %c16_23] : memref<16x32xf32, #tpu.memory_space<vmem>>, vector<1x16xf32>
      %37 = vector.shape_cast %36 : vector<1x16xf32> to vector<16xf32>
      %38 = vector.shape_cast %35 : vector<16xf32> to vector<1x16xf32>
      tpu.vector_store %arg9[%c1_22, %c16_23], %38 {strides = array<i32>} : memref<16x32xf32, #tpu.memory_space<vmem>>, vector<1x16xf32>,
      %c0_24 = arith.constant 0 : index
      %c32 = arith.constant 32 : index
      %39 = vector.load %arg7[%c0_24, %c32] : memref<1x256xf32, #tpu.memory_space<vmem>>, vector<1x16xf32>
      %40 = vector.shape_cast %39 : vector<1x16xf32> to vector<16xf32>
      %cst_25 = arith.constant 3.125000e-02 : f32
      %41 = vector.broadcast %cst_25 : f32 to vector<16xf32>
      %42 = arith.mulf %40, %41 : vector<16xf32>
      %c2 = arith.constant 2 : index
      %c0_26 = arith.constant 0 : index
      %43 = vector.load %arg9[%c2, %c0_26] : memref<16x32xf32, #tpu.memory_space<vmem>>, vector<1x16xf32>
      %44 = vector.shape_cast %43 : vector<1x16xf32> to vector<16xf32>
      %45 = vector.shape_cast %42 : vector<16xf32> to vector<1x16xf32>
      tpu.vector_store %arg9[%c2, %c0_26], %45 {strides = array<i32>} : memref<16x32xf32, #tpu.memory_space<vmem>>, vector<1x16xf32>,
      %c0_27 = arith.constant 0 : index
      %c32_28 = arith.constant 32 : index
      %46 = vector.load %arg8[%c0_27, %c32_28] : memref<1x256xf32, #tpu.memory_space<vmem>>, vector<1x16xf32>
      %47 = vector.shape_cast %46 : vector<1x16xf32> to vector<16xf32>
      %c2_29 = arith.constant 2 : index
      %c16_30 = arith.constant 16 : index
      %48 = vector.load %arg9[%c2_29, %c16_30] : memref<16x32xf32, #tpu.memory_space<vmem>>, vector<1x16xf32>
      %49 = vector.shape_cast %48 : vector<1x16xf32> to vector<16xf32>
      %50 = vector.shape_cast %47 : vector<16xf32> to vector<1x16xf32>
      tpu.vector_store %arg9[%c2_29, %c16_30], %50 {strides = array<i32>} : memref<16x32xf32, #tpu.memory_space<vmem>>, vector<1x16xf32>,
      %c0_31 = arith.constant 0 : index
      %c48 = arith.constant 48 : index
      %51 = vector.load %arg7[%c0_31, %c48] : memref<1x256xf32, #tpu.memory_space<vmem>>, vector<1x16xf32>
      %52 = vector.shape_cast %51 : vector<1x16xf32> to vector<16xf32>
      %cst_32 = arith.constant 3.125000e-02 : f32
      %53 = vector.broadcast %cst_32 : f32 to vector<16xf32>
      %54 = arith.mulf %52, %53 : vector<16xf32>
      %c3 = arith.constant 3 : index
      %c0_33 = arith.constant 0 : index
      %55 = vector.load %arg9[%c3, %c0_33] : memref<16x32xf32, #tpu.memory_space<vmem>>, vector<1x16xf32>
      %56 = vector.shape_cast %55 : vector<1x16xf32> to vector<16xf32>
      %57 = vector.shape_cast %54 : vector<16xf32> to vector<1x16xf32>
      tpu.vector_store %arg9[%c3, %c0_33], %57 {strides = array<i32>} : memref<16x32xf32, #tpu.memory_space<vmem>>, vector<1x16xf32>,
      %c0_34 = arith.constant 0 : index
      %c48_35 = arith.constant 48 : index
      %58 = vector.load %arg8[%c0_34, %c48_35] : memref<1x256xf32, #tpu.memory_space<vmem>>, vector<1x16xf32>
      %59 = vector.shape_cast %58 : vector<1x16xf32> to vector<16xf32>
      %c3_36 = arith.constant 3 : index
      %c16_37 = arith.constant 16 : index
      %60 = vector.load %arg9[%c3_36, %c16_37] : memref<16x32xf32, #tpu.memory_space<vmem>>, vector<1x16xf32>
      %61 = vector.shape_cast %60 : vector<1x16xf32> to vector<16xf32>
      %62 = vector.shape_cast %59 : vector<16xf32> to vector<1x16xf32>
      tpu.vector_store %arg9[%c3_36, %c16_37], %62 {strides = array<i32>} : memref<16x32xf32, #tpu.memory_space<vmem>>, vector<1x16xf32>,
      %c0_38 = arith.constant 0 : index
      %c64 = arith.constant 64 : index
      %63 = vector.load %arg7[%c0_38, %c64] : memref<1x256xf32, #tpu.memory_space<vmem>>, vector<1x16xf32>
      %64 = vector.shape_cast %63 : vector<1x16xf32> to vector<16xf32>
      %cst_39 = arith.constant 3.125000e-02 : f32
      %65 = vector.broadcast %cst_39 : f32 to vector<16xf32>
      %66 = arith.mulf %64, %65 : vector<16xf32>
      %c4 = arith.constant 4 : index
      %c0_40 = arith.constant 0 : index
      %67 = vector.load %arg9[%c4, %c0_40] : memref<16x32xf32, #tpu.memory_space<vmem>>, vector<1x16xf32>
      %68 = vector.shape_cast %67 : vector<1x16xf32> to vector<16xf32>
      %69 = vector.shape_cast %66 : vector<16xf32> to vector<1x16xf32>
      tpu.vector_store %arg9[%c4, %c0_40], %69 {strides = array<i32>} : memref<16x32xf32, #tpu.memory_space<vmem>>, vector<1x16xf32>,
      %c0_41 = arith.constant 0 : index
      %c64_42 = arith.constant 64 : index
      %70 = vector.load %arg8[%c0_41, %c64_42] : memref<1x256xf32, #tpu.memory_space<vmem>>, vector<1x16xf32>
      %71 = vector.shape_cast %70 : vector<1x16xf32> to vector<16xf32>
      %c4_43 = arith.constant 4 : index
      %c16_44 = arith.constant 16 : index
      %72 = vector.load %arg9[%c4_43, %c16_44] : memref<16x32xf32, #tpu.memory_space<vmem>>, vector<1x16xf32>
      %73 = vector.shape_cast %72 : vector<1x16xf32> to vector<16xf32>
      %74 = vector.shape_cast %71 : vector<16xf32> to vector<1x16xf32>
      tpu.vector_store %arg9[%c4_43, %c16_44], %74 {strides = array<i32>} : memref<16x32xf32, #tpu.memory_space<vmem>>, vector<1x16xf32>,
      %c0_45 = arith.constant 0 : index
      %c80 = arith.constant 80 : index
      %75 = vector.load %arg7[%c0_45, %c80] : memref<1x256xf32, #tpu.memory_space<vmem>>, vector<1x16xf32>
      %76 = vector.shape_cast %75 : vector<1x16xf32> to vector<16xf32>
      %cst_46 = arith.constant 3.125000e-02 : f32
      %77 = vector.broadcast %cst_46 : f32 to vector<16xf32>
      %78 = arith.mulf %76, %77 : vector<16xf32>
      %c5 = arith.constant 5 : index
      %c0_47 = arith.constant 0 : index
      %79 = vector.load %arg9[%c5, %c0_47] : memref<16x32xf32, #tpu.memory_space<vmem>>, vector<1x16xf32>
      %80 = vector.shape_cast %79 : vector<1x16xf32> to vector<16xf32>
      %81 = vector.shape_cast %78 : vector<16xf32> to vector<1x16xf32>
      tpu.vector_store %arg9[%c5, %c0_47], %81 {strides = array<i32>} : memref<16x32xf32, #tpu.memory_space<vmem>>, vector<1x16xf32>,
      %c0_48 = arith.constant 0 : index
      %c80_49 = arith.constant 80 : index
      %82 = vector.load %arg8[%c0_48, %c80_49] : memref<1x256xf32, #tpu.memory_space<vmem>>, vector<1x16xf32>
      %83 = vector.shape_cast %82 : vector<1x16xf32> to vector<16xf32>
      %c5_50 = arith.constant 5 : index
      %c16_51 = arith.constant 16 : index
      %84 = vector.load %arg9[%c5_50, %c16_51] : memref<16x32xf32, #tpu.memory_space<vmem>>, vector<1x16xf32>
      %85 = vector.shape_cast %84 : vector<1x16xf32> to vector<16xf32>
      %86 = vector.shape_cast %83 : vector<16xf32> to vector<1x16xf32>
      tpu.vector_store %arg9[%c5_50, %c16_51], %86 {strides = array<i32>} : memref<16x32xf32, #tpu.memory_space<vmem>>, vector<1x16xf32>,
      %c0_52 = arith.constant 0 : index
      %c96 = arith.constant 96 : index
      %87 = vector.load %arg7[%c0_52, %c96] : memref<1x256xf32, #tpu.memory_space<vmem>>, vector<1x16xf32>
      %88 = vector.shape_cast %87 : vector<1x16xf32> to vector<16xf32>
      %cst_53 = arith.constant 3.125000e-02 : f32
      %89 = vector.broadcast %cst_53 : f32 to vector<16xf32>
      %90 = arith.mulf %88, %89 : vector<16xf32>
      %c6 = arith.constant 6 : index
      %c0_54 = arith.constant 0 : index
      %91 = vector.load %arg9[%c6, %c0_54] : memref<16x32xf32, #tpu.memory_space<vmem>>, vector<1x16xf32>
      %92 = vector.shape_cast %91 : vector<1x16xf32> to vector<16xf32>
      %93 = vector.shape_cast %90 : vector<16xf32> to vector<1x16xf32>
      tpu.vector_store %arg9[%c6, %c0_54], %93 {strides = array<i32>} : memref<16x32xf32, #tpu.memory_space<vmem>>, vector<1x16xf32>,
      %c0_55 = arith.constant 0 : index
      %c96_56 = arith.constant 96 : index
      %94 = vector.load %arg8[%c0_55, %c96_56] : memref<1x256xf32, #tpu.memory_space<vmem>>, vector<1x16xf32>
      %95 = vector.shape_cast %94 : vector<1x16xf32> to vector<16xf32>
      %c6_57 = arith.constant 6 : index
      %c16_58 = arith.constant 16 : index
      %96 = vector.load %arg9[%c6_57, %c16_58] : memref<16x32xf32, #tpu.memory_space<vmem>>, vector<1x16xf32>
      %97 = vector.shape_cast %96 : vector<1x16xf32> to vector<16xf32>
      %98 = vector.shape_cast %95 : vector<16xf32> to vector<1x16xf32>
      tpu.vector_store %arg9[%c6_57, %c16_58], %98 {strides = array<i32>} : memref<16x32xf32, #tpu.memory_space<vmem>>, vector<1x16xf32>,
      %c0_59 = arith.constant 0 : index
      %c112 = arith.constant 112 : index
      %99 = vector.load %arg7[%c0_59, %c112] : memref<1x256xf32, #tpu.memory_space<vmem>>, vector<1x16xf32>
      %100 = vector.shape_cast %99 : vector<1x16xf32> to vector<16xf32>
      %cst_60 = arith.constant 3.125000e-02 : f32
      %101 = vector.broadcast %cst_60 : f32 to vector<16xf32>
      %102 = arith.mulf %100, %101 : vector<16xf32>
      %c7 = arith.constant 7 : index
      %c0_61 = arith.constant 0 : index
      %103 = vector.load %arg9[%c7, %c0_61] : memref<16x32xf32, #tpu.memory_space<vmem>>, vector<1x16xf32>
      %104 = vector.shape_cast %103 : vector<1x16xf32> to vector<16xf32>
      %105 = vector.shape_cast %102 : vector<16xf32> to vector<1x16xf32>
      tpu.vector_store %arg9[%c7, %c0_61], %105 {strides = array<i32>} : memref<16x32xf32, #tpu.memory_space<vmem>>, vector<1x16xf32>,
      %c0_62 = arith.constant 0 : index
      %c112_63 = arith.constant 112 : index
      %106 = vector.load %arg8[%c0_62, %c112_63] : memref<1x256xf32, #tpu.memory_space<vmem>>, vector<1x16xf32>
      %107 = vector.shape_cast %106 : vector<1x16xf32> to vector<16xf32>
      %c7_64 = arith.constant 7 : index
      %c16_65 = arith.constant 16 : index
      %108 = vector.load %arg9[%c7_64, %c16_65] : memref<16x32xf32, #tpu.memory_space<vmem>>, vector<1x16xf32>
      %109 = vector.shape_cast %108 : vector<1x16xf32> to vector<16xf32>
      %110 = vector.shape_cast %107 : vector<16xf32> to vector<1x16xf32>
      tpu.vector_store %arg9[%c7_64, %c16_65], %110 {strides = array<i32>} : memref<16x32xf32, #tpu.memory_space<vmem>>, vector<1x16xf32>,
      %c0_66 = arith.constant 0 : index
      %c128 = arith.constant 128 : index
      %111 = vector.load %arg7[%c0_66, %c128] : memref<1x256xf32, #tpu.memory_space<vmem>>, vector<1x16xf32>
      %112 = vector.shape_cast %111 : vector<1x16xf32> to vector<16xf32>
      %cst_67 = arith.constant 3.125000e-02 : f32
      %113 = vector.broadcast %cst_67 : f32 to vector<16xf32>
      %114 = arith.mulf %112, %113 : vector<16xf32>
      %c8 = arith.constant 8 : index
      %c0_68 = arith.constant 0 : index
      %115 = vector.load %arg9[%c8, %c0_68] : memref<16x32xf32, #tpu.memory_space<vmem>>, vector<1x16xf32>
      %116 = vector.shape_cast %115 : vector<1x16xf32> to vector<16xf32>
      %117 = vector.shape_cast %114 : vector<16xf32> to vector<1x16xf32>
      tpu.vector_store %arg9[%c8, %c0_68], %117 {strides = array<i32>} : memref<16x32xf32, #tpu.memory_space<vmem>>, vector<1x16xf32>,
      %c0_69 = arith.constant 0 : index
      %c128_70 = arith.constant 128 : index
      %118 = vector.load %arg8[%c0_69, %c128_70] : memref<1x256xf32, #tpu.memory_space<vmem>>, vector<1x16xf32>
      %119 = vector.shape_cast %118 : vector<1x16xf32> to vector<16xf32>
      %c8_71 = arith.constant 8 : index
      %c16_72 = arith.constant 16 : index
      %120 = vector.load %arg9[%c8_71, %c16_72] : memref<16x32xf32, #tpu.memory_space<vmem>>, vector<1x16xf32>
      %121 = vector.shape_cast %120 : vector<1x16xf32> to vector<16xf32>
      %122 = vector.shape_cast %119 : vector<16xf32> to vector<1x16xf32>
      tpu.vector_store %arg9[%c8_71, %c16_72], %122 {strides = array<i32>} : memref<16x32xf32, #tpu.memory_space<vmem>>, vector<1x16xf32>,
      %c0_73 = arith.constant 0 : index
      %c144 = arith.constant 144 : index
      %123 = vector.load %arg7[%c0_73, %c144] : memref<1x256xf32, #tpu.memory_space<vmem>>, vector<1x16xf32>
      %124 = vector.shape_cast %123 : vector<1x16xf32> to vector<16xf32>
      %cst_74 = arith.constant 3.125000e-02 : f32
      %125 = vector.broadcast %cst_74 : f32 to vector<16xf32>
      %126 = arith.mulf %124, %125 : vector<16xf32>
      %c9 = arith.constant 9 : index
      %c0_75 = arith.constant 0 : index
      %127 = vector.load %arg9[%c9, %c0_75] : memref<16x32xf32, #tpu.memory_space<vmem>>, vector<1x16xf32>
      %128 = vector.shape_cast %127 : vector<1x16xf32> to vector<16xf32>
      %129 = vector.shape_cast %126 : vector<16xf32> to vector<1x16xf32>
      tpu.vector_store %arg9[%c9, %c0_75], %129 {strides = array<i32>} : memref<16x32xf32, #tpu.memory_space<vmem>>, vector<1x16xf32>,
      %c0_76 = arith.constant 0 : index
      %c144_77 = arith.constant 144 : index
      %130 = vector.load %arg8[%c0_76, %c144_77] : memref<1x256xf32, #tpu.memory_space<vmem>>, vector<1x16xf32>
      %131 = vector.shape_cast %130 : vector<1x16xf32> to vector<16xf32>
      %c9_78 = arith.constant 9 : index
      %c16_79 = arith.constant 16 : index
      %132 = vector.load %arg9[%c9_78, %c16_79] : memref<16x32xf32, #tpu.memory_space<vmem>>, vector<1x16xf32>
      %133 = vector.shape_cast %132 : vector<1x16xf32> to vector<16xf32>
      %134 = vector.shape_cast %131 : vector<16xf32> to vector<1x16xf32>
      tpu.vector_store %arg9[%c9_78, %c16_79], %134 {strides = array<i32>} : memref<16x32xf32, #tpu.memory_space<vmem>>, vector<1x16xf32>,
      %c0_80 = arith.constant 0 : index
      %c160 = arith.constant 160 : index
      %135 = vector.load %arg7[%c0_80, %c160] : memref<1x256xf32, #tpu.memory_space<vmem>>, vector<1x16xf32>
      %136 = vector.shape_cast %135 : vector<1x16xf32> to vector<16xf32>
      %cst_81 = arith.constant 3.125000e-02 : f32
      %137 = vector.broadcast %cst_81 : f32 to vector<16xf32>
      %138 = arith.mulf %136, %137 : vector<16xf32>
      %c10 = arith.constant 10 : index
      %c0_82 = arith.constant 0 : index
      %139 = vector.load %arg9[%c10, %c0_82] : memref<16x32xf32, #tpu.memory_space<vmem>>, vector<1x16xf32>
      %140 = vector.shape_cast %139 : vector<1x16xf32> to vector<16xf32>
      %141 = vector.shape_cast %138 : vector<16xf32> to vector<1x16xf32>
      tpu.vector_store %arg9[%c10, %c0_82], %141 {strides = array<i32>} : memref<16x32xf32, #tpu.memory_space<vmem>>, vector<1x16xf32>,
      %c0_83 = arith.constant 0 : index
      %c160_84 = arith.constant 160 : index
      %142 = vector.load %arg8[%c0_83, %c160_84] : memref<1x256xf32, #tpu.memory_space<vmem>>, vector<1x16xf32>
      %143 = vector.shape_cast %142 : vector<1x16xf32> to vector<16xf32>
      %c10_85 = arith.constant 10 : index
      %c16_86 = arith.constant 16 : index
      %144 = vector.load %arg9[%c10_85, %c16_86] : memref<16x32xf32, #tpu.memory_space<vmem>>, vector<1x16xf32>
      %145 = vector.shape_cast %144 : vector<1x16xf32> to vector<16xf32>
      %146 = vector.shape_cast %143 : vector<16xf32> to vector<1x16xf32>
      tpu.vector_store %arg9[%c10_85, %c16_86], %146 {strides = array<i32>} : memref<16x32xf32, #tpu.memory_space<vmem>>, vector<1x16xf32>,
      %c0_87 = arith.constant 0 : index
      %c176 = arith.constant 176 : index
      %147 = vector.load %arg7[%c0_87, %c176] : memref<1x256xf32, #tpu.memory_space<vmem>>, vector<1x16xf32>
      %148 = vector.shape_cast %147 : vector<1x16xf32> to vector<16xf32>
      %cst_88 = arith.constant 3.125000e-02 : f32
      %149 = vector.broadcast %cst_88 : f32 to vector<16xf32>
      %150 = arith.mulf %148, %149 : vector<16xf32>
      %c11 = arith.constant 11 : index
      %c0_89 = arith.constant 0 : index
      %151 = vector.load %arg9[%c11, %c0_89] : memref<16x32xf32, #tpu.memory_space<vmem>>, vector<1x16xf32>
      %152 = vector.shape_cast %151 : vector<1x16xf32> to vector<16xf32>
      %153 = vector.shape_cast %150 : vector<16xf32> to vector<1x16xf32>
      tpu.vector_store %arg9[%c11, %c0_89], %153 {strides = array<i32>} : memref<16x32xf32, #tpu.memory_space<vmem>>, vector<1x16xf32>,
      %c0_90 = arith.constant 0 : index
      %c176_91 = arith.constant 176 : index
      %154 = vector.load %arg8[%c0_90, %c176_91] : memref<1x256xf32, #tpu.memory_space<vmem>>, vector<1x16xf32>
      %155 = vector.shape_cast %154 : vector<1x16xf32> to vector<16xf32>
      %c11_92 = arith.constant 11 : index
      %c16_93 = arith.constant 16 : index
      %156 = vector.load %arg9[%c11_92, %c16_93] : memref<16x32xf32, #tpu.memory_space<vmem>>, vector<1x16xf32>
      %157 = vector.shape_cast %156 : vector<1x16xf32> to vector<16xf32>
      %158 = vector.shape_cast %155 : vector<16xf32> to vector<1x16xf32>
      tpu.vector_store %arg9[%c11_92, %c16_93], %158 {strides = array<i32>} : memref<16x32xf32, #tpu.memory_space<vmem>>, vector<1x16xf32>,
      %c0_94 = arith.constant 0 : index
      %c192 = arith.constant 192 : index
      %159 = vector.load %arg7[%c0_94, %c192] : memref<1x256xf32, #tpu.memory_space<vmem>>, vector<1x16xf32>
      %160 = vector.shape_cast %159 : vector<1x16xf32> to vector<16xf32>
      %cst_95 = arith.constant 3.125000e-02 : f32
      %161 = vector.broadcast %cst_95 : f32 to vector<16xf32>
      %162 = arith.mulf %160, %161 : vector<16xf32>
      %c12 = arith.constant 12 : index
      %c0_96 = arith.constant 0 : index
      %163 = vector.load %arg9[%c12, %c0_96] : memref<16x32xf32, #tpu.memory_space<vmem>>, vector<1x16xf32>
      %164 = vector.shape_cast %163 : vector<1x16xf32> to vector<16xf32>
      %165 = vector.shape_cast %162 : vector<16xf32> to vector<1x16xf32>
      tpu.vector_store %arg9[%c12, %c0_96], %165 {strides = array<i32>} : memref<16x32xf32, #tpu.memory_space<vmem>>, vector<1x16xf32>,
      %c0_97 = arith.constant 0 : index
      %c192_98 = arith.constant 192 : index
      %166 = vector.load %arg8[%c0_97, %c192_98] : memref<1x256xf32, #tpu.memory_space<vmem>>, vector<1x16xf32>
      %167 = vector.shape_cast %166 : vector<1x16xf32> to vector<16xf32>
      %c12_99 = arith.constant 12 : index
      %c16_100 = arith.constant 16 : index
      %168 = vector.load %arg9[%c12_99, %c16_100] : memref<16x32xf32, #tpu.memory_space<vmem>>, vector<1x16xf32>
      %169 = vector.shape_cast %168 : vector<1x16xf32> to vector<16xf32>
      %170 = vector.shape_cast %167 : vector<16xf32> to vector<1x16xf32>
      tpu.vector_store %arg9[%c12_99, %c16_100], %170 {strides = array<i32>} : memref<16x32xf32, #tpu.memory_space<vmem>>, vector<1x16xf32>,
      %c0_101 = arith.constant 0 : index
      %c208 = arith.constant 208 : index
      %171 = vector.load %arg7[%c0_101, %c208] : memref<1x256xf32, #tpu.memory_space<vmem>>, vector<1x16xf32>
      %172 = vector.shape_cast %171 : vector<1x16xf32> to vector<16xf32>
      %cst_102 = arith.constant 3.125000e-02 : f32
      %173 = vector.broadcast %cst_102 : f32 to vector<16xf32>
      %174 = arith.mulf %172, %173 : vector<16xf32>
      %c13 = arith.constant 13 : index
      %c0_103 = arith.constant 0 : index
      %175 = vector.load %arg9[%c13, %c0_103] : memref<16x32xf32, #tpu.memory_space<vmem>>, vector<1x16xf32>
      %176 = vector.shape_cast %175 : vector<1x16xf32> to vector<16xf32>
      %177 = vector.shape_cast %174 : vector<16xf32> to vector<1x16xf32>
      tpu.vector_store %arg9[%c13, %c0_103], %177 {strides = array<i32>} : memref<16x32xf32, #tpu.memory_space<vmem>>, vector<1x16xf32>,
      %c0_104 = arith.constant 0 : index
      %c208_105 = arith.constant 208 : index
      %178 = vector.load %arg8[%c0_104, %c208_105] : memref<1x256xf32, #tpu.memory_space<vmem>>, vector<1x16xf32>
      %179 = vector.shape_cast %178 : vector<1x16xf32> to vector<16xf32>
      %c13_106 = arith.constant 13 : index
      %c16_107 = arith.constant 16 : index
      %180 = vector.load %arg9[%c13_106, %c16_107] : memref<16x32xf32, #tpu.memory_space<vmem>>, vector<1x16xf32>
      %181 = vector.shape_cast %180 : vector<1x16xf32> to vector<16xf32>
      %182 = vector.shape_cast %179 : vector<16xf32> to vector<1x16xf32>
      tpu.vector_store %arg9[%c13_106, %c16_107], %182 {strides = array<i32>} : memref<16x32xf32, #tpu.memory_space<vmem>>, vector<1x16xf32>,
      %c0_108 = arith.constant 0 : index
      %c224 = arith.constant 224 : index
      %183 = vector.load %arg7[%c0_108, %c224] : memref<1x256xf32, #tpu.memory_space<vmem>>, vector<1x16xf32>
      %184 = vector.shape_cast %183 : vector<1x16xf32> to vector<16xf32>
      %cst_109 = arith.constant 3.125000e-02 : f32
      %185 = vector.broadcast %cst_109 : f32 to vector<16xf32>
      %186 = arith.mulf %184, %185 : vector<16xf32>
      %c14 = arith.constant 14 : index
      %c0_110 = arith.constant 0 : index
      %187 = vector.load %arg9[%c14, %c0_110] : memref<16x32xf32, #tpu.memory_space<vmem>>, vector<1x16xf32>
      %188 = vector.shape_cast %187 : vector<1x16xf32> to vector<16xf32>
      %189 = vector.shape_cast %186 : vector<16xf32> to vector<1x16xf32>
      tpu.vector_store %arg9[%c14, %c0_110], %189 {strides = array<i32>} : memref<16x32xf32, #tpu.memory_space<vmem>>, vector<1x16xf32>,
      %c0_111 = arith.constant 0 : index
      %c224_112 = arith.constant 224 : index
      %190 = vector.load %arg8[%c0_111, %c224_112] : memref<1x256xf32, #tpu.memory_space<vmem>>, vector<1x16xf32>
      %191 = vector.shape_cast %190 : vector<1x16xf32> to vector<16xf32>
      %c14_113 = arith.constant 14 : index
      %c16_114 = arith.constant 16 : index
      %192 = vector.load %arg9[%c14_113, %c16_114] : memref<16x32xf32, #tpu.memory_space<vmem>>, vector<1x16xf32>
      %193 = vector.shape_cast %192 : vector<1x16xf32> to vector<16xf32>
      %194 = vector.shape_cast %191 : vector<16xf32> to vector<1x16xf32>
      tpu.vector_store %arg9[%c14_113, %c16_114], %194 {strides = array<i32>} : memref<16x32xf32, #tpu.memory_space<vmem>>, vector<1x16xf32>,
      %c0_115 = arith.constant 0 : index
      %c240 = arith.constant 240 : index
      %195 = vector.load %arg7[%c0_115, %c240] : memref<1x256xf32, #tpu.memory_space<vmem>>, vector<1x16xf32>
      %196 = vector.shape_cast %195 : vector<1x16xf32> to vector<16xf32>
      %cst_116 = arith.constant 3.125000e-02 : f32
      %197 = vector.broadcast %cst_116 : f32 to vector<16xf32>
      %198 = arith.mulf %196, %197 : vector<16xf32>
      %c15 = arith.constant 15 : index
      %c0_117 = arith.constant 0 : index
      %199 = vector.load %arg9[%c15, %c0_117] : memref<16x32xf32, #tpu.memory_space<vmem>>, vector<1x16xf32>
      %200 = vector.shape_cast %199 : vector<1x16xf32> to vector<16xf32>
      %201 = vector.shape_cast %198 : vector<16xf32> to vector<1x16xf32>
      tpu.vector_store %arg9[%c15, %c0_117], %201 {strides = array<i32>} : memref<16x32xf32, #tpu.memory_space<vmem>>, vector<1x16xf32>,
      %c0_118 = arith.constant 0 : index
      %c240_119 = arith.constant 240 : index
      %202 = vector.load %arg8[%c0_118, %c240_119] : memref<1x256xf32, #tpu.memory_space<vmem>>, vector<1x16xf32>
      %203 = vector.shape_cast %202 : vector<1x16xf32> to vector<16xf32>
      %c15_120 = arith.constant 15 : index
      %c16_121 = arith.constant 16 : index
      %204 = vector.load %arg9[%c15_120, %c16_121] : memref<16x32xf32, #tpu.memory_space<vmem>>, vector<1x16xf32>
      %205 = vector.shape_cast %204 : vector<1x16xf32> to vector<16xf32>
      %206 = vector.shape_cast %203 : vector<16xf32> to vector<1x16xf32>
      tpu.vector_store %arg9[%c15_120, %c16_121], %206 {strides = array<i32>} : memref<16x32xf32, #tpu.memory_space<vmem>>, vector<1x16xf32>,
      %c0_122 = arith.constant 0 : index
      %c0_123 = arith.constant 0 : index
      %207 = vector.load %arg9[%c0_122, %c0_123] : memref<16x32xf32, #tpu.memory_space<vmem>>, vector<16x32xf32>
      %c0_124 = arith.constant 0 : index
      %c0_125 = arith.constant 0 : index
      %c0_126 = arith.constant 0 : index
      %208 = vector.load %arg3[%c0_124, %c0_125, %c0_126] : memref<7x32x16xf32, #tpu.memory_space<vmem>>, vector<1x32x16xf32>
      %209 = vector.shape_cast %208 : vector<1x32x16xf32> to vector<32x16xf32>
      %cst_127 = arith.constant dense<0.000000e+00> : vector<16x16xf32>
      %210 = tpu.matmul %207, %209, %cst_127 {dimension_numbers = #tpu.dot_dimension_numbers<[1], [0], [0], [1], [0, 0, 1, 1], [], []>} : vector<16x32xf32>, vector<32x16xf32>, vector<16x16xf32> -> vector<16x16xf32>
      %c0_128 = arith.constant 0 : index
      %c0_129 = arith.constant 0 : index
      %211 = vector.load %arg10[%c0_128, %c0_129] : memref<112x16xf32, #tpu.memory_space<vmem>>, vector<16x16xf32>
      tpu.vector_store %arg10[%c0_128, %c0_129], %210 {strides = array<i32>} : memref<112x16xf32, #tpu.memory_space<vmem>>, vector<16x16xf32>,
      %c1_130 = arith.constant 1 : index
      %c0_131 = arith.constant 0 : index
      %c0_132 = arith.constant 0 : index
      %212 = vector.load %arg3[%c1_130, %c0_131, %c0_132] : memref<7x32x16xf32, #tpu.memory_space<vmem>>, vector<1x32x16xf32>
      %213 = vector.shape_cast %212 : vector<1x32x16xf32> to vector<32x16xf32>
      %cst_133 = arith.constant dense<0.000000e+00> : vector<16x16xf32>
      %214 = tpu.matmul %207, %213, %cst_133 {dimension_numbers = #tpu.dot_dimension_numbers<[1], [0], [0], [1], [0, 0, 1, 1], [], []>} : vector<16x32xf32>, vector<32x16xf32>, vector<16x16xf32> -> vector<16x16xf32>
      %c16_134 = arith.constant 16 : index
      %c0_135 = arith.constant 0 : index
      %215 = vector.load %arg10[%c16_134, %c0_135] : memref<112x16xf32, #tpu.memory_space<vmem>>, vector<16x16xf32>
      tpu.vector_store %arg10[%c16_134, %c0_135], %214 {strides = array<i32>} : memref<112x16xf32, #tpu.memory_space<vmem>>, vector<16x16xf32>,
      %c2_136 = arith.constant 2 : index
      %c0_137 = arith.constant 0 : index
      %c0_138 = arith.constant 0 : index
      %216 = vector.load %arg3[%c2_136, %c0_137, %c0_138] : memref<7x32x16xf32, #tpu.memory_space<vmem>>, vector<1x32x16xf32>
      %217 = vector.shape_cast %216 : vector<1x32x16xf32> to vector<32x16xf32>
      %cst_139 = arith.constant dense<0.000000e+00> : vector<16x16xf32>
      %218 = tpu.matmul %207, %217, %cst_139 {dimension_numbers = #tpu.dot_dimension_numbers<[1], [0], [0], [1], [0, 0, 1, 1], [], []>} : vector<16x32xf32>, vector<32x16xf32>, vector<16x16xf32> -> vector<16x16xf32>
      %c32_140 = arith.constant 32 : index
      %c0_141 = arith.constant 0 : index
      %219 = vector.load %arg10[%c32_140, %c0_141] : memref<112x16xf32, #tpu.memory_space<vmem>>, vector<16x16xf32>
      tpu.vector_store %arg10[%c32_140, %c0_141], %218 {strides = array<i32>} : memref<112x16xf32, #tpu.memory_space<vmem>>, vector<16x16xf32>,
      %c3_142 = arith.constant 3 : index
      %c0_143 = arith.constant 0 : index
      %c0_144 = arith.constant 0 : index
      %220 = vector.load %arg3[%c3_142, %c0_143, %c0_144] : memref<7x32x16xf32, #tpu.memory_space<vmem>>, vector<1x32x16xf32>
      %221 = vector.shape_cast %220 : vector<1x32x16xf32> to vector<32x16xf32>
      %cst_145 = arith.constant dense<0.000000e+00> : vector<16x16xf32>
      %222 = tpu.matmul %207, %221, %cst_145 {dimension_numbers = #tpu.dot_dimension_numbers<[1], [0], [0], [1], [0, 0, 1, 1], [], []>} : vector<16x32xf32>, vector<32x16xf32>, vector<16x16xf32> -> vector<16x16xf32>
      %c48_146 = arith.constant 48 : index
      %c0_147 = arith.constant 0 : index
      %223 = vector.load %arg10[%c48_146, %c0_147] : memref<112x16xf32, #tpu.memory_space<vmem>>, vector<16x16xf32>
      tpu.vector_store %arg10[%c48_146, %c0_147], %222 {strides = array<i32>} : memref<112x16xf32, #tpu.memory_space<vmem>>, vector<16x16xf32>,
      %c4_148 = arith.constant 4 : index
      %c0_149 = arith.constant 0 : index
      %c0_150 = arith.constant 0 : index
      %224 = vector.load %arg3[%c4_148, %c0_149, %c0_150] : memref<7x32x16xf32, #tpu.memory_space<vmem>>, vector<1x32x16xf32>
      %225 = vector.shape_cast %224 : vector<1x32x16xf32> to vector<32x16xf32>
      %cst_151 = arith.constant dense<0.000000e+00> : vector<16x16xf32>
      %226 = tpu.matmul %207, %225, %cst_151 {dimension_numbers = #tpu.dot_dimension_numbers<[1], [0], [0], [1], [0, 0, 1, 1], [], []>} : vector<16x32xf32>, vector<32x16xf32>, vector<16x16xf32> -> vector<16x16xf32>
      %c64_152 = arith.constant 64 : index
      %c0_153 = arith.constant 0 : index
      %227 = vector.load %arg10[%c64_152, %c0_153] : memref<112x16xf32, #tpu.memory_space<vmem>>, vector<16x16xf32>
      tpu.vector_store %arg10[%c64_152, %c0_153], %226 {strides = array<i32>} : memref<112x16xf32, #tpu.memory_space<vmem>>, vector<16x16xf32>,
      %c5_154 = arith.constant 5 : index
      %c0_155 = arith.constant 0 : index
      %c0_156 = arith.constant 0 : index
      %228 = vector.load %arg3[%c5_154, %c0_155, %c0_156] : memref<7x32x16xf32, #tpu.memory_space<vmem>>, vector<1x32x16xf32>
      %229 = vector.shape_cast %228 : vector<1x32x16xf32> to vector<32x16xf32>
      %cst_157 = arith.constant dense<0.000000e+00> : vector<16x16xf32>
      %230 = tpu.matmul %207, %229, %cst_157 {dimension_numbers = #tpu.dot_dimension_numbers<[1], [0], [0], [1], [0, 0, 1, 1], [], []>} : vector<16x32xf32>, vector<32x16xf32>, vector<16x16xf32> -> vector<16x16xf32>
      %c80_158 = arith.constant 80 : index
      %c0_159 = arith.constant 0 : index
      %231 = vector.load %arg10[%c80_158, %c0_159] : memref<112x16xf32, #tpu.memory_space<vmem>>, vector<16x16xf32>
      tpu.vector_store %arg10[%c80_158, %c0_159], %230 {strides = array<i32>} : memref<112x16xf32, #tpu.memory_space<vmem>>, vector<16x16xf32>,
      %c6_160 = arith.constant 6 : index
      %c0_161 = arith.constant 0 : index
      %c0_162 = arith.constant 0 : index
      %232 = vector.load %arg3[%c6_160, %c0_161, %c0_162] : memref<7x32x16xf32, #tpu.memory_space<vmem>>, vector<1x32x16xf32>
      %233 = vector.shape_cast %232 : vector<1x32x16xf32> to vector<32x16xf32>
      %cst_163 = arith.constant dense<0.000000e+00> : vector<16x16xf32>
      %234 = tpu.matmul %207, %233, %cst_163 {dimension_numbers = #tpu.dot_dimension_numbers<[1], [0], [0], [1], [0, 0, 1, 1], [], []>} : vector<16x32xf32>, vector<32x16xf32>, vector<16x16xf32> -> vector<16x16xf32>
      %c96_164 = arith.constant 96 : index
      %c0_165 = arith.constant 0 : index
      %235 = vector.load %arg10[%c96_164, %c0_165] : memref<112x16xf32, #tpu.memory_space<vmem>>, vector<16x16xf32>
      tpu.vector_store %arg10[%c96_164, %c0_165], %234 {strides = array<i32>} : memref<112x16xf32, #tpu.memory_space<vmem>>, vector<16x16xf32>,
      %c0_166 = arith.constant 0 : index
      %c0_167 = arith.constant 0 : index
      %236 = vector.load %arg4[%c0_166, %c0_167] : memref<16x112xf32, #tpu.memory_space<vmem>>, vector<16x112xf32>
      %c0_168 = arith.constant 0 : index
      %c0_169 = arith.constant 0 : index
      %237 = vector.load %arg10[%c0_168, %c0_169] : memref<112x16xf32, #tpu.memory_space<vmem>>, vector<112x16xf32>
      %cst_170 = arith.constant dense<0.000000e+00> : vector<16x16xf32>
      %238 = tpu.matmul %236, %237, %cst_170 {dimension_numbers = #tpu.dot_dimension_numbers<[1], [0], [0], [1], [0, 0, 1, 1], [], []>} : vector<16x112xf32>, vector<112x16xf32>, vector<16x16xf32> -> vector<16x16xf32>
      %c0_171 = arith.constant 0 : index
      %c0_172 = arith.constant 0 : index
      %239 = memref.load %arg5[%c0_171, %c0_172] : memref<1x1xf32, #tpu.memory_space<smem>>
      %240 = vector.broadcast %239 : f32 to vector<16x16xf32>
      %241 = arith.addf %238, %240 : vector<16x16xf32>
      %cst_173 = arith.constant 0.000000e+00 : f32
      %242 = vector.broadcast %cst_173 : f32 to vector<16x16xf32>
      %243 = arith.subf %242, %241 : vector<16x16xf32>
      %244 = math.exp %243 : vector<16x16xf32>
      %cst_174 = arith.constant 1.000000e+00 : f32
      %245 = vector.broadcast %cst_174 : f32 to vector<16x16xf32>
      %246 = arith.addf %245, %244 : vector<16x16xf32>
      %247 = tpu.reciprocal %246 {approx = true} : vector<16x16xf32> -> vector<16x16xf32>
      %248 = vector.extract_strided_slice %247 {offsets = [0, 0], sizes = [1, 16], strides = [1, 1]} : vector<16x16xf32> to vector<1x16xf32>
      %249 = vector.shape_cast %248 : vector<1x16xf32> to vector<16xf32>
      %c0_175 = arith.constant 0 : index
      %c0_176 = arith.constant 0 : index
      %c0_177 = arith.constant 0 : index
      %250 = vector.load %arg6[%c0_175, %c0_176, %c0_177] : memref<1x1x256xf32, #tpu.memory_space<vmem>>, vector<1x1x16xf32>
      %251 = vector.shape_cast %250 : vector<1x1x16xf32> to vector<16xf32>
      %252 = vector.shape_cast %249 : vector<16xf32> to vector<1x1x16xf32>
      tpu.vector_store %arg6[%c0_175, %c0_176, %c0_177], %252 {strides = array<i32>} : memref<1x1x256xf32, #tpu.memory_space<vmem>>, vector<1x1x16xf32>,
      %253 = vector.extract_strided_slice %247 {offsets = [1, 0], sizes = [1, 16], strides = [1, 1]} : vector<16x16xf32> to vector<1x16xf32>
      %254 = vector.shape_cast %253 : vector<1x16xf32> to vector<16xf32>
      %c0_178 = arith.constant 0 : index
      %c0_179 = arith.constant 0 : index
      %c16_180 = arith.constant 16 : index
      %255 = vector.load %arg6[%c0_178, %c0_179, %c16_180] : memref<1x1x256xf32, #tpu.memory_space<vmem>>, vector<1x1x16xf32>
      %256 = vector.shape_cast %255 : vector<1x1x16xf32> to vector<16xf32>
      %257 = vector.shape_cast %254 : vector<16xf32> to vector<1x1x16xf32>
      tpu.vector_store %arg6[%c0_178, %c0_179, %c16_180], %257 {strides = array<i32>} : memref<1x1x256xf32, #tpu.memory_space<vmem>>, vector<1x1x16xf32>,
      %258 = vector.extract_strided_slice %247 {offsets = [2, 0], sizes = [1, 16], strides = [1, 1]} : vector<16x16xf32> to vector<1x16xf32>
      %259 = vector.shape_cast %258 : vector<1x16xf32> to vector<16xf32>
      %c0_181 = arith.constant 0 : index
      %c0_182 = arith.constant 0 : index
      %c32_183 = arith.constant 32 : index
      %260 = vector.load %arg6[%c0_181, %c0_182, %c32_183] : memref<1x1x256xf32, #tpu.memory_space<vmem>>, vector<1x1x16xf32>
      %261 = vector.shape_cast %260 : vector<1x1x16xf32> to vector<16xf32>
      %262 = vector.shape_cast %259 : vector<16xf32> to vector<1x1x16xf32>
      tpu.vector_store %arg6[%c0_181, %c0_182, %c32_183], %262 {strides = array<i32>} : memref<1x1x256xf32, #tpu.memory_space<vmem>>, vector<1x1x16xf32>,
      %263 = vector.extract_strided_slice %247 {offsets = [3, 0], sizes = [1, 16], strides = [1, 1]} : vector<16x16xf32> to vector<1x16xf32>
      %264 = vector.shape_cast %263 : vector<1x16xf32> to vector<16xf32>
      %c0_184 = arith.constant 0 : index
      %c0_185 = arith.constant 0 : index
      %c48_186 = arith.constant 48 : index
      %265 = vector.load %arg6[%c0_184, %c0_185, %c48_186] : memref<1x1x256xf32, #tpu.memory_space<vmem>>, vector<1x1x16xf32>
      %266 = vector.shape_cast %265 : vector<1x1x16xf32> to vector<16xf32>
      %267 = vector.shape_cast %264 : vector<16xf32> to vector<1x1x16xf32>
      tpu.vector_store %arg6[%c0_184, %c0_185, %c48_186], %267 {strides = array<i32>} : memref<1x1x256xf32, #tpu.memory_space<vmem>>, vector<1x1x16xf32>,
      %268 = vector.extract_strided_slice %247 {offsets = [4, 0], sizes = [1, 16], strides = [1, 1]} : vector<16x16xf32> to vector<1x16xf32>
      %269 = vector.shape_cast %268 : vector<1x16xf32> to vector<16xf32>
      %c0_187 = arith.constant 0 : index
      %c0_188 = arith.constant 0 : index
      %c64_189 = arith.constant 64 : index
      %270 = vector.load %arg6[%c0_187, %c0_188, %c64_189] : memref<1x1x256xf32, #tpu.memory_space<vmem>>, vector<1x1x16xf32>
      %271 = vector.shape_cast %270 : vector<1x1x16xf32> to vector<16xf32>
      %272 = vector.shape_cast %269 : vector<16xf32> to vector<1x1x16xf32>
      tpu.vector_store %arg6[%c0_187, %c0_188, %c64_189], %272 {strides = array<i32>} : memref<1x1x256xf32, #tpu.memory_space<vmem>>, vector<1x1x16xf32>,
      %273 = vector.extract_strided_slice %247 {offsets = [5, 0], sizes = [1, 16], strides = [1, 1]} : vector<16x16xf32> to vector<1x16xf32>
      %274 = vector.shape_cast %273 : vector<1x16xf32> to vector<16xf32>
      %c0_190 = arith.constant 0 : index
      %c0_191 = arith.constant 0 : index
      %c80_192 = arith.constant 80 : index
      %275 = vector.load %arg6[%c0_190, %c0_191, %c80_192] : memref<1x1x256xf32, #tpu.memory_space<vmem>>, vector<1x1x16xf32>
      %276 = vector.shape_cast %275 : vector<1x1x16xf32> to vector<16xf32>
      %277 = vector.shape_cast %274 : vector<16xf32> to vector<1x1x16xf32>
      tpu.vector_store %arg6[%c0_190, %c0_191, %c80_192], %277 {strides = array<i32>} : memref<1x1x256xf32, #tpu.memory_space<vmem>>, vector<1x1x16xf32>,
      %278 = vector.extract_strided_slice %247 {offsets = [6, 0], sizes = [1, 16], strides = [1, 1]} : vector<16x16xf32> to vector<1x16xf32>
      %279 = vector.shape_cast %278 : vector<1x16xf32> to vector<16xf32>
      %c0_193 = arith.constant 0 : index
      %c0_194 = arith.constant 0 : index
      %c96_195 = arith.constant 96 : index
      %280 = vector.load %arg6[%c0_193, %c0_194, %c96_195] : memref<1x1x256xf32, #tpu.memory_space<vmem>>, vector<1x1x16xf32>
      %281 = vector.shape_cast %280 : vector<1x1x16xf32> to vector<16xf32>
      %282 = vector.shape_cast %279 : vector<16xf32> to vector<1x1x16xf32>
      tpu.vector_store %arg6[%c0_193, %c0_194, %c96_195], %282 {strides = array<i32>} : memref<1x1x256xf32, #tpu.memory_space<vmem>>, vector<1x1x16xf32>,
      %283 = vector.extract_strided_slice %247 {offsets = [7, 0], sizes = [1, 16], strides = [1, 1]} : vector<16x16xf32> to vector<1x16xf32>
      %284 = vector.shape_cast %283 : vector<1x16xf32> to vector<16xf32>
      %c0_196 = arith.constant 0 : index
      %c0_197 = arith.constant 0 : index
      %c112_198 = arith.constant 112 : index
      %285 = vector.load %arg6[%c0_196, %c0_197, %c112_198] : memref<1x1x256xf32, #tpu.memory_space<vmem>>, vector<1x1x16xf32>
      %286 = vector.shape_cast %285 : vector<1x1x16xf32> to vector<16xf32>
      %287 = vector.shape_cast %284 : vector<16xf32> to vector<1x1x16xf32>
      tpu.vector_store %arg6[%c0_196, %c0_197, %c112_198], %287 {strides = array<i32>} : memref<1x1x256xf32, #tpu.memory_space<vmem>>, vector<1x1x16xf32>,
      %288 = vector.extract_strided_slice %247 {offsets = [8, 0], sizes = [1, 16], strides = [1, 1]} : vector<16x16xf32> to vector<1x16xf32>
      %289 = vector.shape_cast %288 : vector<1x16xf32> to vector<16xf32>
      %c0_199 = arith.constant 0 : index
      %c0_200 = arith.constant 0 : index
      %c128_201 = arith.constant 128 : index
      %290 = vector.load %arg6[%c0_199, %c0_200, %c128_201] : memref<1x1x256xf32, #tpu.memory_space<vmem>>, vector<1x1x16xf32>
      %291 = vector.shape_cast %290 : vector<1x1x16xf32> to vector<16xf32>
      %292 = vector.shape_cast %289 : vector<16xf32> to vector<1x1x16xf32>
      tpu.vector_store %arg6[%c0_199, %c0_200, %c128_201], %292 {strides = array<i32>} : memref<1x1x256xf32, #tpu.memory_space<vmem>>, vector<1x1x16xf32>,
      %293 = vector.extract_strided_slice %247 {offsets = [9, 0], sizes = [1, 16], strides = [1, 1]} : vector<16x16xf32> to vector<1x16xf32>
      %294 = vector.shape_cast %293 : vector<1x16xf32> to vector<16xf32>
      %c0_202 = arith.constant 0 : index
      %c0_203 = arith.constant 0 : index
      %c144_204 = arith.constant 144 : index
      %295 = vector.load %arg6[%c0_202, %c0_203, %c144_204] : memref<1x1x256xf32, #tpu.memory_space<vmem>>, vector<1x1x16xf32>
      %296 = vector.shape_cast %295 : vector<1x1x16xf32> to vector<16xf32>
      %297 = vector.shape_cast %294 : vector<16xf32> to vector<1x1x16xf32>
      tpu.vector_store %arg6[%c0_202, %c0_203, %c144_204], %297 {strides = array<i32>} : memref<1x1x256xf32, #tpu.memory_space<vmem>>, vector<1x1x16xf32>,
      %298 = vector.extract_strided_slice %247 {offsets = [10, 0], sizes = [1, 16], strides = [1, 1]} : vector<16x16xf32> to vector<1x16xf32>
      %299 = vector.shape_cast %298 : vector<1x16xf32> to vector<16xf32>
      %c0_205 = arith.constant 0 : index
      %c0_206 = arith.constant 0 : index
      %c160_207 = arith.constant 160 : index
      %300 = vector.load %arg6[%c0_205, %c0_206, %c160_207] : memref<1x1x256xf32, #tpu.memory_space<vmem>>, vector<1x1x16xf32>
      %301 = vector.shape_cast %300 : vector<1x1x16xf32> to vector<16xf32>
      %302 = vector.shape_cast %299 : vector<16xf32> to vector<1x1x16xf32>
      tpu.vector_store %arg6[%c0_205, %c0_206, %c160_207], %302 {strides = array<i32>} : memref<1x1x256xf32, #tpu.memory_space<vmem>>, vector<1x1x16xf32>,
      %303 = vector.extract_strided_slice %247 {offsets = [11, 0], sizes = [1, 16], strides = [1, 1]} : vector<16x16xf32> to vector<1x16xf32>
      %304 = vector.shape_cast %303 : vector<1x16xf32> to vector<16xf32>
      %c0_208 = arith.constant 0 : index
      %c0_209 = arith.constant 0 : index
      %c176_210 = arith.constant 176 : index
      %305 = vector.load %arg6[%c0_208, %c0_209, %c176_210] : memref<1x1x256xf32, #tpu.memory_space<vmem>>, vector<1x1x16xf32>
      %306 = vector.shape_cast %305 : vector<1x1x16xf32> to vector<16xf32>
      %307 = vector.shape_cast %304 : vector<16xf32> to vector<1x1x16xf32>
      tpu.vector_store %arg6[%c0_208, %c0_209, %c176_210], %307 {strides = array<i32>} : memref<1x1x256xf32, #tpu.memory_space<vmem>>, vector<1x1x16xf32>,
      %308 = vector.extract_strided_slice %247 {offsets = [12, 0], sizes = [1, 16], strides = [1, 1]} : vector<16x16xf32> to vector<1x16xf32>
      %309 = vector.shape_cast %308 : vector<1x16xf32> to vector<16xf32>
      %c0_211 = arith.constant 0 : index
      %c0_212 = arith.constant 0 : index
      %c192_213 = arith.constant 192 : index
      %310 = vector.load %arg6[%c0_211, %c0_212, %c192_213] : memref<1x1x256xf32, #tpu.memory_space<vmem>>, vector<1x1x16xf32>
      %311 = vector.shape_cast %310 : vector<1x1x16xf32> to vector<16xf32>
      %312 = vector.shape_cast %309 : vector<16xf32> to vector<1x1x16xf32>
      tpu.vector_store %arg6[%c0_211, %c0_212, %c192_213], %312 {strides = array<i32>} : memref<1x1x256xf32, #tpu.memory_space<vmem>>, vector<1x1x16xf32>,
      %313 = vector.extract_strided_slice %247 {offsets = [13, 0], sizes = [1, 16], strides = [1, 1]} : vector<16x16xf32> to vector<1x16xf32>
      %314 = vector.shape_cast %313 : vector<1x16xf32> to vector<16xf32>
      %c0_214 = arith.constant 0 : index
      %c0_215 = arith.constant 0 : index
      %c208_216 = arith.constant 208 : index
      %315 = vector.load %arg6[%c0_214, %c0_215, %c208_216] : memref<1x1x256xf32, #tpu.memory_space<vmem>>, vector<1x1x16xf32>
      %316 = vector.shape_cast %315 : vector<1x1x16xf32> to vector<16xf32>
      %317 = vector.shape_cast %314 : vector<16xf32> to vector<1x1x16xf32>
      tpu.vector_store %arg6[%c0_214, %c0_215, %c208_216], %317 {strides = array<i32>} : memref<1x1x256xf32, #tpu.memory_space<vmem>>, vector<1x1x16xf32>,
      %318 = vector.extract_strided_slice %247 {offsets = [14, 0], sizes = [1, 16], strides = [1, 1]} : vector<16x16xf32> to vector<1x16xf32>
      %319 = vector.shape_cast %318 : vector<1x16xf32> to vector<16xf32>
      %c0_217 = arith.constant 0 : index
      %c0_218 = arith.constant 0 : index
      %c224_219 = arith.constant 224 : index
      %320 = vector.load %arg6[%c0_217, %c0_218, %c224_219] : memref<1x1x256xf32, #tpu.memory_space<vmem>>, vector<1x1x16xf32>
      %321 = vector.shape_cast %320 : vector<1x1x16xf32> to vector<16xf32>
      %322 = vector.shape_cast %319 : vector<16xf32> to vector<1x1x16xf32>
      tpu.vector_store %arg6[%c0_217, %c0_218, %c224_219], %322 {strides = array<i32>} : memref<1x1x256xf32, #tpu.memory_space<vmem>>, vector<1x1x16xf32>,
      %323 = vector.extract_strided_slice %247 {offsets = [15, 0], sizes = [1, 16], strides = [1, 1]} : vector<16x16xf32> to vector<1x16xf32>
      %324 = vector.shape_cast %323 : vector<1x16xf32> to vector<16xf32>
      %c0_220 = arith.constant 0 : index
      %c0_221 = arith.constant 0 : index
      %c240_222 = arith.constant 240 : index
      %325 = vector.load %arg6[%c0_220, %c0_221, %c240_222] : memref<1x1x256xf32, #tpu.memory_space<vmem>>, vector<1x1x16xf32>
      %326 = vector.shape_cast %325 : vector<1x1x16xf32> to vector<16xf32>
      %327 = vector.shape_cast %324 : vector<16xf32> to vector<1x1x16xf32>
      tpu.vector_store %arg6[%c0_220, %c0_221, %c240_222], %327 {strides = array<i32>} : memref<1x1x256xf32, #tpu.memory_space<vmem>>, vector<1x1x16xf32>,
    } else {
    }
    return
  }
  func.func @transform_0(%arg0: i32, %arg1: i32) -> (i32, i32, i32) {
    %c0_i32 = arith.constant 0 : i32
    %c0_i32_0 = arith.constant 0 : i32
    return %arg0, %arg1, %c0_i32 : i32, i32, i32
  }
  func.func @transform_1(%arg0: i32, %arg1: i32) -> (i32, i32, i32) {
    %c0_i32 = arith.constant 0 : i32
    %c0_i32_0 = arith.constant 0 : i32
    %c0_i32_1 = arith.constant 0 : i32
    %c0_i32_2 = arith.constant 0 : i32
    return %c0_i32, %c0_i32_0, %c0_i32_1 : i32, i32, i32
  }
  func.func @transform_2(%arg0: i32, %arg1: i32) -> (i32, i32) {
    %c0_i32 = arith.constant 0 : i32
    %c0_i32_0 = arith.constant 0 : i32
    %c0_i32_1 = arith.constant 0 : i32
    return %c0_i32, %c0_i32_0 : i32, i32
  }
  func.func @transform_3(%arg0: i32, %arg1: i32) -> (i32, i32) {
    %c0_i32 = arith.constant 0 : i32
    %c0_i32_0 = arith.constant 0 : i32
    %c0_i32_1 = arith.constant 0 : i32
    return %c0_i32, %c0_i32_0 : i32, i32
  }
  func.func @transform_4(%arg0: i32, %arg1: i32) -> (i32, i32, i32) {
    %c0_i32 = arith.constant 0 : i32
    %c0_i32_0 = arith.constant 0 : i32
    %c0_i32_1 = arith.constant 0 : i32
    return %arg0, %c0_i32, %c0_i32_0 : i32, i32, i32
  }
}

</mosaic_0001>

<llo_original>
// kernel: tpu_custom_call.1
$region0: #{tpu_custom_call.1}
  #allocation0 [shape = 'u32[]', space=smem, size = 0x4, offset = 0x4, fixed_abs, tag = 'smem constant byte address 0x4 - core index']
  #allocation1 [shape = 'u32[144,128]{1,0:T(1,128)}', space=vmem, size = 0x12000, scoped, tag = 'internal scratch']
  #allocation2 [shape = 'f32[1,256]{1,0:T(1,128)}', space=vmem, size = 0x400, scoped, tag = 'scratch operand']
  #allocation3 [shape = 'f32[1,256]{1,0:T(1,128)}', space=vmem, size = 0x400, scoped, tag = 'scratch operand']
  #allocation4 [shape = 'f32[16,32]{1,0:T(8,128)}', space=vmem, size = 0x2000, scoped, tag = 'scratch operand']
  #allocation5 [shape = 'f32[112,16]{1,0:T(8,128)}', space=vmem, size = 0xe000, scoped, tag = 'scratch operand']
  #allocation6 [shape = 'f32[1,1]{1,0:T(1,128)S(6)}', space=smem, size = 0x200, scoped, tag = 'scoped memory for tpu_custom_call.1']
  %s0 = inlined_call_operand.vmem [shape: f32[2,32,256], index: 0, kind: input, shape index: {}]
  %s1 = inlined_call_operand.vmem [shape: f32[7,32,16], index: 1, kind: input, shape index: {}]
  %s2 = inlined_call_operand.vmem [shape: f32[16,112], index: 2, kind: input, shape index: {}]
  %s3 = inlined_call_operand.<no memory space> [shape: f32[1,1], index: 3, kind: input, shape index: {}]
  %s4 = inlined_call_operand.hbm [shape: f32[2,1,256], index: 4, kind: output, shape index: {}]
  %s5 = sld [smem:[#allocation0]]
  $region61: #{tpu_custom_call.1} parent=0
    _
  %s7 = ssub.s32 1, %s5
  %s8 = scalar_select 0, %s7, %s5
  %9 = sst [smem:[#allocation6]] %s3
  $region1: #{tpu_custom_call.1} parent=0
    #allocation7 [shape = 'u8[2048]{0}', space=vmem, size = 0x800, scoped, tag = 'output window, operand 0']
    #allocation8 [shape = 's32[2]{0}', space=sflag, size = 0x8, scoped, tag = 'scoped memory for tpu_custom_call.1']
    %10 = vsyncpa [#allocation8], 0
    %s11 = scalar_lea.sflag [#allocation8], 1
    %12 = vsyncpa %s11, 0
    loop: start=0, step=1, limit=4
    $region2: #{tpu_custom_call.1} parent=1 // loop_pre_header
      _
    $region3: #{tpu_custom_call.1} parent=1 // loop_header
      %s14 = sphi 0, %s18
      %p15 = scmp.ge.s32.totalorder %s14, 4
      %s21 = sphi 0, %s33
      %s22 = sphi 0, %s29
      %s23 = sphi 0, %s21
      %s24 = sphi 0, %s22
      %s25 = sphi 0, %s23
      %s26 = sphi 0, %s24
      %s38 = sphi 0, %s40
      %s41 = sphi 0, %s38
      %s42 = sphi 0, %s41
      %s58 = sphi 0, %s42
      %s62 = sphi 0, %s62
      %s64 = sphi 0, %s62
      %s65 = sphi 0, %s64
      %s79 = sphi 0, %s65
      %s83 = sphi 0, %s83
      %s85 = sphi 0, %s83
      %s86 = sphi 0, %s85
      %s100 = sphi 0, %s86
      %s104 = sphi 0, %s104
      %s106 = sphi 0, %s104
      %s107 = sphi 0, %s106
      %s121 = sphi 0, %s107
      %s127 = sphi 0, %s129
      %s130 = sphi 0, %s127
      %s131 = sphi 0, %s130
      %s147 = sphi 0, %s131
    $region4: #{tpu_custom_call.1} parent=1 // loop_header_branch
      %17 = sbr.rel (%p15) target = $region8
    $region5: #{tpu_custom_call.1} parent=1 // loop_body
      %s19 = ssub.s32 %s14, 1
      %s20 = ssub.s32 %s14, 2
      %s27 = sadd.s32 1, %s22
      %p28 = scmp.ge.s32.totalorder %s27, 1
      %s29 = scalar_select %p28, 0, %s27
      %s30 = sadd.s32 1, %s21
      %s31 = scalar_select %p28, %s30, %s21
      %p32 = scmp.ge.s32.totalorder %s31, 2
      %s33 = scalar_select %p32, 0, %s31
      %s34 = ssub.s32 %s21, %s33
      %s35 = ssub.s32 %s22, %s29
      %s36 = sor.u32 %s34, %s35
      %p37 = scmp.eq.s32.totalorder %s36, 0
      %s39 = sadd.s32 %s38, 1
      %s40 = scalar_select %p37, %s38, %s39
      %p43 = pneg %p37
      %p44 = scmp.eq.s32.totalorder %s14, 1
      %p45 = por %p43, %p44
      %p46 = scmp.ne.s32.totalorder %s38, %s41
      %p47 = scmp.eq.s32.totalorder %s14, 0
      %p48 = por %p46, %p47
      %p49 = scmp.ne.s32.totalorder %s38, %s41
      %p50 = scmp.eq.s32.totalorder %s19, 1
      %p51 = por %p49, %p50
      %p52 = scmp.ne.s32.totalorder %s41, %s42
      %p53 = scmp.eq.s32.totalorder %s19, 0
      %p54 = por %p52, %p53
      %p55 = scmp.ne.s32.totalorder %s41, %s42
      %p56 = scmp.eq.s32.totalorder %s20, 1
      %p57 = por %p55, %p56
      %p59 = scmp.ne.s32.totalorder %s42, %s58
      %p60 = scmp.eq.s32.totalorder %s20, 0
      %p61 = por %p59, %p60
      %s63 = sadd.s32 %s62, 1
      %p66 = scmp.eq.s32.totalorder %s14, 1
      %p67 = scmp.ne.s32.totalorder %s62, %s64
      %p68 = scmp.eq.s32.totalorder %s14, 0
      %p69 = por %p67, %p68
      %p70 = scmp.ne.s32.totalorder %s62, %s64
      %p71 = scmp.eq.s32.totalorder %s19, 1
      %p72 = por %p70, %p71
      %p73 = scmp.ne.s32.totalorder %s64, %s65
      %p74 = scmp.eq.s32.totalorder %s19, 0
      %p75 = por %p73, %p74
      %p76 = scmp.ne.s32.totalorder %s64, %s65
      %p77 = scmp.eq.s32.totalorder %s20, 1
      %p78 = por %p76, %p77
      %p80 = scmp.ne.s32.totalorder %s65, %s79
      %p81 = scmp.eq.s32.totalorder %s20, 0
      %p82 = por %p80, %p81
      %s84 = sadd.s32 %s83, 1
      %p87 = scmp.eq.s32.totalorder %s14, 1
      %p88 = scmp.ne.s32.totalorder %s83, %s85
      %p89 = scmp.eq.s32.totalorder %s14, 0
      %p90 = por %p88, %p89
      %p91 = scmp.ne.s32.totalorder %s83, %s85
      %p92 = scmp.eq.s32.totalorder %s19, 1
      %p93 = por %p91, %p92
      %p94 = scmp.ne.s32.totalorder %s85, %s86
      %p95 = scmp.eq.s32.totalorder %s19, 0
      %p96 = por %p94, %p95
      %p97 = scmp.ne.s32.totalorder %s85, %s86
      %p98 = scmp.eq.s32.totalorder %s20, 1
      %p99 = por %p97, %p98
      %p101 = scmp.ne.s32.totalorder %s86, %s100
      %p102 = scmp.eq.s32.totalorder %s20, 0
      %p103 = por %p101, %p102
      %s105 = sadd.s32 %s104, 1
      %p108 = scmp.eq.s32.totalorder %s14, 1
      %p109 = scmp.ne.s32.totalorder %s104, %s106
      %p110 = scmp.eq.s32.totalorder %s14, 0
      %p111 = por %p109, %p110
      %p112 = scmp.ne.s32.totalorder %s104, %s106
      %p113 = scmp.eq.s32.totalorder %s19, 1
      %p114 = por %p112, %p113
      %p115 = scmp.ne.s32.totalorder %s106, %s107
      %p116 = scmp.eq.s32.totalorder %s19, 0
      %p117 = por %p115, %p116
      %p118 = scmp.ne.s32.totalorder %s106, %s107
      %p119 = scmp.eq.s32.totalorder %s20, 1
      %p120 = por %p118, %p119
      %p122 = scmp.ne.s32.totalorder %s107, %s121
      %p123 = scmp.eq.s32.totalorder %s20, 0
      %p124 = por %p122, %p123
      %s125 = ssub.s32 %s21, %s33
      %p126 = scmp.eq.s32.totalorder %s125, 0
      %s128 = sadd.s32 %s127, 1
      %s129 = scalar_select %p126, %s127, %s128
      %p132 = pneg %p126
      %p133 = scmp.eq.s32.totalorder %s14, 1
      %p134 = por %p132, %p133
      %p135 = scmp.ne.s32.totalorder %s127, %s130
      %p136 = scmp.eq.s32.totalorder %s14, 0
      %p137 = por %p135, %p136
      %p138 = scmp.ne.s32.totalorder %s127, %s130
      %p139 = scmp.eq.s32.totalorder %s19, 1
      %p140 = por %p138, %p139
      %p141 = scmp.ne.s32.totalorder %s130, %s131
      %p142 = scmp.eq.s32.totalorder %s19, 0
      %p143 = por %p141, %p142
      %p144 = scmp.ne.s32.totalorder %s130, %s131
      %p145 = scmp.eq.s32.totalorder %s20, 1
      %p146 = por %p144, %p145
      %p148 = scmp.ne.s32.totalorder %s131, %s147
      %p149 = scmp.eq.s32.totalorder %s20, 0
      %p150 = por %p148, %p149
      %p151 = scmp.le.s32.totalorder 1, %s14
      %p152 = scmp.lt.s32.totalorder %s14, 3
      %p153 = pnand %p151, %p152
      %p154 = pneg %p153
      // Predicated region
      $region9: #{tpu_custom_call.1} parent=5 // pred_check
        _
      $region10: #{tpu_custom_call.1} parent=5 // pred_check_branch
        %156 = sbr.rel (%p153) target = $region12
      $region11: #{tpu_custom_call.1} parent=5 // pred_region
        %s157 = ssub.s32 %s14, 1
        // Predicated region
        $region13: #{tpu_custom_call.1} parent=11 // pred_check
          %p158 = pneg %p75
        $region14: #{tpu_custom_call.1} parent=11 // pred_check_branch
          %160 = sbr.rel (%p158) target = $region16
        $region15: #{tpu_custom_call.1} parent=11 // pred_region
          _
        $region16: #{tpu_custom_call.1} parent=11 // pred_fallthru
          _
        // Predicated region
        $region17: #{tpu_custom_call.1} parent=11 // pred_check
          %p161 = pneg %p96
        $region18: #{tpu_custom_call.1} parent=11 // pred_check_branch
          %163 = sbr.rel (%p161) target = $region20
        $region19: #{tpu_custom_call.1} parent=11 // pred_region
          _
        $region20: #{tpu_custom_call.1} parent=11 // pred_fallthru
          _
        // Predicated region
        $region21: #{tpu_custom_call.1} parent=11 // pred_check
          %p164 = pneg %p117
        $region22: #{tpu_custom_call.1} parent=11 // pred_check_branch
          %166 = sbr.rel (%p164) target = $region24
        $region23: #{tpu_custom_call.1} parent=11 // pred_region
          _
        $region24: #{tpu_custom_call.1} parent=11 // pred_fallthru
          _
      $region12: #{tpu_custom_call.1} parent=5 // pred_fallthru
        _
      %p167 = scmp.lt.s32.totalorder %s14, 2
      // Predicated region
      $region25: #{tpu_custom_call.1} parent=5 // pred_check
        %p168 = pneg %p167
      $region26: #{tpu_custom_call.1} parent=5 // pred_check_branch
        %170 = sbr.rel (%p168) target = $region28
      $region27: #{tpu_custom_call.1} parent=5 // pred_region
        // Predicated region
        $region29: #{tpu_custom_call.1} parent=27 // pred_check
          %p171 = pneg %p48
        $region30: #{tpu_custom_call.1} parent=27 // pred_check_branch
          %173 = sbr.rel (%p171) target = $region32
        $region31: #{tpu_custom_call.1} parent=27 // pred_region
          %s174 = smul.u32 4, %s22
          %p175 = scmp.lt.s32.totalorder %s21, 1
          %s176 = scalar_select %p175, %s21, 1
          %p177 = scmp.lt.s32.totalorder %s174, 3
          %s178 = scalar_select %p177, %s174, 3
          %s179 = smul.addr %s178, 2
          %s180 = smul.addr %s176, 8
          %s181 = sadd.s32 %s179, %s180
          %s182 = smul.addr %s181, 8
          %s183 = scalar_lea.vmem %s0, %s182
          %s184 = smul.u32 4, %s22
        $region32: #{tpu_custom_call.1} parent=27 // pred_fallthru
          _
      $region28: #{tpu_custom_call.1} parent=5 // pred_fallthru
        _
      %p185 = scmp.le.s32.totalorder 1, %s14
      %p186 = scmp.lt.s32.totalorder %s14, 3
      %p187 = pnand %p185, %p186
      %p188 = pneg %p187
      // Predicated region
      $region33: #{tpu_custom_call.1} parent=5 // pred_check
        _
      $region34: #{tpu_custom_call.1} parent=5 // pred_check_branch
        %190 = sbr.rel (%p187) target = $region36
      $region35: #{tpu_custom_call.1} parent=5 // pred_region
        %s191 = ssub.s32 %s14, 1
        %s192 = smul.u32 4, %s24
        %p193 = scmp.lt.s32.totalorder %s23, 1
        %s194 = scalar_select %p193, %s23, 1
        %p195 = scmp.lt.s32.totalorder %s192, 3
        %s196 = scalar_select %p195, %s192, 3
        %s197 = smul.addr %s196, 2
        %s198 = smul.addr %s194, 8
        %s199 = sadd.s32 %s197, %s198
        %s200 = smul.addr %s199, 8
        %s201 = scalar_lea.vmem %s0, %s200
        %p202 = pneg %p54
        %p203 = pneg %p51
        %p204 = pneg %p75
        %p205 = pneg %p72
        %p206 = pneg %p96
        %p207 = pneg %p93
        %p208 = pneg %p117
        %p209 = pneg %p114
        %p210 = pneg %p143
        %p211 = pneg %p140
        %s212 = sand.u32 %s130, 1
        %s213 = scalar_lea.sflag [#allocation8], %s212
        %s214 = sand.u32 %s130, 1
        %s215 = smul.addr %s214, 2
        %s216 = scalar_lea.vmem [#allocation7], %s215
        %s217 = smul.u32 4, %s24
        %p218 = scmp.lt.s32.totalorder %s23, 1
        %s219 = scalar_select %p218, %s23, 1
        %p220 = scmp.lt.s32.totalorder %s217, 3
        %s221 = scalar_select %p220, %s217, 3
        %s222 = smul.addr %s221, 2
        %s223 = smul.addr %s219, 8
        %s224 = sadd.s32 %s222, %s223
        %s225 = smul.addr %s224, 8
        %s226 = scalar_lea.vmem %s0, %s225
        %s227 = smul.u32 4, %s24
        %v228 = vld [vmem:[%s226] sm:$0xff]
        %v229 = vld [vmem:[%s226 + $0x8] sm:$0xff]
        %v230 = vld [vmem:[%s226 + $0x10] sm:$0xff]
        %v231 = vld [vmem:[%s226 + $0x18] sm:$0xff]
        %v232 = vld [vmem:[%s226 + $0x20] sm:$0xff]
        %v233 = vld [vmem:[%s226 + $0x28] sm:$0xff]
        %v234 = vld [vmem:[%s226 + $0x30] sm:$0xff]
        %v235 = vld [vmem:[%s226 + $0x38] sm:$0xff]
        %v236 = vadd.f32 %v228, %v230
        %v237 = vadd.f32 %v236, %v232
        %v238 = vadd.f32 %v237, %v234
        %v239 = vrot.slane %v238, 4
        %v240 = vadd.f32 %v238, %v239
        %v241 = vrot.slane %v240, 2
        %v242 = vadd.f32 %v240, %v241
        %v243 = vrot.slane %v242, 1
        %v244 = vadd.f32 %v242, %v243
        %v245 = vadd.f32 %v229, %v231
        %v246 = vadd.f32 %v245, %v233
        %v247 = vadd.f32 %v246, %v235
        %v248 = vrot.slane %v247, 4
        %v249 = vadd.f32 %v247, %v248
        %v250 = vrot.slane %v249, 2
        %v251 = vadd.f32 %v249, %v250
        %v252 = vrot.slane %v251, 1
        %v253 = vadd.f32 %v251, %v252
        %v254 = vmax.f32 %v228, %v232
        %v255 = vmax.f32 %v230, %v234
        %v256 = vmax.f32 %v254, %v255
        %v257 = vrot.slane %v256, 4
        %v258 = vmax.f32 %v256, %v257
        %v259 = vrot.slane %v258, 2
        %v260 = vmax.f32 %v258, %v259
        %v261 = vrot.slane %v260, 1
        %v262 = vmax.f32 %v260, %v261
        %v263 = vmax.f32 %v229, %v233
        %v264 = vmax.f32 %v231, %v235
        %v265 = vmax.f32 %v263, %v264
        %v266 = vrot.slane %v265, 4
        %v267 = vmax.f32 %v265, %v266
        %v268 = vrot.slane %v267, 2
        %v269 = vmax.f32 %v267, %v268
        %v270 = vrot.slane %v269, 1
        %v271 = vmax.f32 %v269, %v270
        %p272 = scmp.eq.s32.totalorder %s24, 0
        // Predicated region
        $region37: #{tpu_custom_call.1} parent=35 // pred_check
          %p273 = pneg %p272
        $region38: #{tpu_custom_call.1} parent=35 // pred_check_branch
          %275 = sbr.rel (%p273) target = $region40
        $region39: #{tpu_custom_call.1} parent=35 // pred_region
          %v278 = vcombine.low %v244, %v253
          %v280 = vunpack.c.l.s4 1966171168
          %v281 = vunpack.c.0.s8 %v280
          %v282 = vlaneseq
          %v283 = vshrl.u32 %v282, 7
          %v284 = vsub.s32 %v281, %v283
          %v285 = vrot.slane %v278, %v284
          %v287 = vunpack.c.l.s4 1966171168
          %v288 = vunpack.c.0.s8 %v287
          %v289 = vlaneseq
          %v290 = vshrl.u32 %v289, 7
          %v291 = vsub.s32 %v288, %v290
          %v292 = vrot.slane %v285, %v291
          %v294 = vlaneseq
          %vm295 = vcmp.ge.s32.totalorder %v294, 0
          %vm296 = vcmp.lt.s32.totalorder %v294, 256
          %vm297 = vmand %vm295, %vm296
          %298 = vst.msk [vmem:[#allocation2] sm:$0x3] %vm297, %v292
          %v301 = vcombine.low %v262, %v271
          %v303 = vunpack.c.l.s4 1966171168
          %v304 = vunpack.c.0.s8 %v303
          %v305 = vlaneseq
          %v306 = vshrl.u32 %v305, 7
          %v307 = vsub.s32 %v304, %v306
          %v308 = vrot.slane %v301, %v307
          %v310 = vunpack.c.l.s4 1966171168
          %v311 = vunpack.c.0.s8 %v310
          %v312 = vlaneseq
          %v313 = vshrl.u32 %v312, 7
          %v314 = vsub.s32 %v311, %v313
          %v315 = vrot.slane %v308, %v314
          %317 = vst.msk [vmem:[#allocation3] sm:$0x3] %vm297, %v315
        $region40: #{tpu_custom_call.1} parent=35 // pred_fallthru
          _
        %p318 = scmp.gt.s32.totalorder %s24, 0
        // Predicated region
        $region41: #{tpu_custom_call.1} parent=35 // pred_check
          %p319 = pneg %p318
        $region42: #{tpu_custom_call.1} parent=35 // pred_check_branch
          %321 = sbr.rel (%p319) target = $region44
        $region43: #{tpu_custom_call.1} parent=35 // pred_region
          %v322 = vld [vmem:[#allocation2] sm:$0x3]
          %v325 = vcombine.low %v244, %v253
          %v327 = vunpack.c.l.s4 1966171168
          %v328 = vunpack.c.0.s8 %v327
          %v329 = vlaneseq
          %v330 = vshrl.u32 %v329, 7
          %v331 = vsub.s32 %v328, %v330
          %v332 = vrot.slane %v325, %v331
          %v334 = vunpack.c.l.s4 1966171168
          %v335 = vunpack.c.0.s8 %v334
          %v336 = vlaneseq
          %v337 = vshrl.u32 %v336, 7
          %v338 = vsub.s32 %v335, %v337
          %v339 = vrot.slane %v332, %v338
          %v341 = vadd.f32 %v322, %v339
          %v342 = vlaneseq
          %vm343 = vcmp.ge.s32.totalorder %v342, 0
          %vm344 = vcmp.lt.s32.totalorder %v342, 256
          %vm345 = vmand %vm343, %vm344
          %346 = vst.msk [vmem:[#allocation2] sm:$0x3] %vm345, %v341
          %v347 = vld [vmem:[#allocation3] sm:$0x3]
          %v350 = vcombine.low %v262, %v271
          %v352 = vunpack.c.l.s4 1966171168
          %v353 = vunpack.c.0.s8 %v352
          %v354 = vlaneseq
          %v355 = vshrl.u32 %v354, 7
          %v356 = vsub.s32 %v353, %v355
          %v357 = vrot.slane %v350, %v356
          %v359 = vunpack.c.l.s4 1966171168
          %v360 = vunpack.c.0.s8 %v359
          %v361 = vlaneseq
          %v362 = vshrl.u32 %v361, 7
          %v363 = vsub.s32 %v360, %v362
          %v364 = vrot.slane %v357, %v363
          %v366 = vmax.f32 %v347, %v364
          %367 = vst.msk [vmem:[#allocation3] sm:$0x3] %vm345, %v366
        $region44: #{tpu_custom_call.1} parent=35 // pred_fallthru
          _
        // Predicated region
        $region45: #{tpu_custom_call.1} parent=35 // pred_check
          %p368 = pneg %p272
        $region46: #{tpu_custom_call.1} parent=35 // pred_check_branch
          %370 = sbr.rel (%p368) target = $region48
        $region47: #{tpu_custom_call.1} parent=35 // pred_region
          %v371 = vld [vmem:[#allocation2] sm:$0x1]
          %v372 = vmul.f32 %v371, 0.03125
          %vm373 = vcmask 122880
          %374 = vst.msk [vmem:[#allocation4] sm:$0x1] %vm373, %v372
          %v375 = vld [vmem:[#allocation3] sm:$0x1]
          %v377 = vlaneseq
          %v378 = vshrl.u32 %v377, 7
          %v379 = vsub.s32 0, %v378
          %v380 = vrot.slane %v375, %v379
          %381 = vrot.lane.b32.xlu0 %v380, 16
          %v382 = vpop.permute.xlu0 %381
          %vm384 = vcmask 254080
          %385 = vst.msk [vmem:[#allocation4] sm:$0x1] %vm384, %v382
          %v386 = vld [vmem:[#allocation2] sm:$0x1]
          %v387 = vmul.f32 %v386, 0.03125
          %v389 = vlaneseq
          %v390 = vshrl.u32 %v389, 7
          %v391 = vsub.s32 0, %v390
          %v392 = vrot.slane %v387, %v391
          %393 = vrot.lane.b32.xlu0 %v392, 112
          %v394 = vpop.permute.xlu0 %393
          %396 = vst.msk [vmem:[#allocation4 + $0x1] sm:$0x1] %vm373, %v394
          %v397 = vld [vmem:[#allocation3] sm:$0x1]
          %398 = vst.msk [vmem:[#allocation4 + $0x1] sm:$0x1] %vm384, %v397
          %v399 = vld [vmem:[#allocation2] sm:$0x1]
          %v400 = vmul.f32 %v399, 0.03125
          %v402 = vlaneseq
          %v403 = vshrl.u32 %v402, 7
          %v404 = vsub.s32 0, %v403
          %v405 = vrot.slane %v400, %v404
          %406 = vrot.lane.b32.xlu0 %v405, 96
          %v407 = vpop.permute.xlu0 %406
          %409 = vst.msk [vmem:[#allocation4 + $0x2] sm:$0x1] %vm373, %v407
          %v410 = vld [vmem:[#allocation3] sm:$0x1]
          %v412 = vlaneseq
          %v413 = vshrl.u32 %v412, 7
          %v414 = vsub.s32 0, %v413
          %v415 = vrot.slane %v410, %v414
          %416 = vrot.lane.b32.xlu0 %v415, 112
          %v417 = vpop.permute.xlu0 %416
          %419 = vst.msk [vmem:[#allocation4 + $0x2] sm:$0x1] %vm384, %v417
          %v420 = vld [vmem:[#allocation2] sm:$0x1]
          %v421 = vmul.f32 %v420, 0.03125
          %v423 = vlaneseq
          %v424 = vshrl.u32 %v423, 7
          %v425 = vsub.s32 0, %v424
          %v426 = vrot.slane %v421, %v425
          %427 = vrot.lane.b32.xlu0 %v426, 80
          %v428 = vpop.permute.xlu0 %427
          %430 = vst.msk [vmem:[#allocation4 + $0x3] sm:$0x1] %vm373, %v428
          %v431 = vld [vmem:[#allocation3] sm:$0x1]
          %v433 = vlaneseq
          %v434 = vshrl.u32 %v433, 7
          %v435 = vsub.s32 0, %v434
          %v436 = vrot.slane %v431, %v435
          %437 = vrot.lane.b32.xlu0 %v436, 96
          %v438 = vpop.permute.xlu0 %437
          %440 = vst.msk [vmem:[#allocation4 + $0x3] sm:$0x1] %vm384, %v438
          %v441 = vld [vmem:[#allocation2] sm:$0x1]
          %v442 = vmul.f32 %v441, 0.03125
          %v444 = vlaneseq
          %v445 = vshrl.u32 %v444, 7
          %v446 = vsub.s32 0, %v445
          %v447 = vrot.slane %v442, %v446
          %448 = vrot.lane.b32.xlu0 %v447, 64
          %v449 = vpop.permute.xlu0 %448
          %451 = vst.msk [vmem:[#allocation4 + $0x4] sm:$0x1] %vm373, %v449
          %v452 = vld [vmem:[#allocation3] sm:$0x1]
          %v454 = vlaneseq
          %v455 = vshrl.u32 %v454, 7
          %v456 = vsub.s32 0, %v455
          %v457 = vrot.slane %v452, %v456
          %458 = vrot.lane.b32.xlu0 %v457, 80
          %v459 = vpop.permute.xlu0 %458
          %461 = vst.msk [vmem:[#allocation4 + $0x4] sm:$0x1] %vm384, %v459
          %v462 = vld [vmem:[#allocation2] sm:$0x1]
          %v463 = vmul.f32 %v462, 0.03125
          %v465 = vlaneseq
          %v466 = vshrl.u32 %v465, 7
          %v467 = vsub.s32 0, %v466
          %v468 = vrot.slane %v463, %v467
          %469 = vrot.lane.b32.xlu0 %v468, 48
          %v470 = vpop.permute.xlu0 %469
          %472 = vst.msk [vmem:[#allocation4 + $0x5] sm:$0x1] %vm373, %v470
          %v473 = vld [vmem:[#allocation3] sm:$0x1]
          %v475 = vlaneseq
          %v476 = vshrl.u32 %v475, 7
          %v477 = vsub.s32 0, %v476
          %v478 = vrot.slane %v473, %v477
          %479 = vrot.lane.b32.xlu0 %v478, 64
          %v480 = vpop.permute.xlu0 %479
          %482 = vst.msk [vmem:[#allocation4 + $0x5] sm:$0x1] %vm384, %v480
          %v483 = vld [vmem:[#allocation2] sm:$0x1]
          %v484 = vmul.f32 %v483, 0.03125
          %v486 = vlaneseq
          %v487 = vshrl.u32 %v486, 7
          %v488 = vsub.s32 0, %v487
          %v489 = vrot.slane %v484, %v488
          %490 = vrot.lane.b32.xlu0 %v489, 32
          %v491 = vpop.permute.xlu0 %490
          %493 = vst.msk [vmem:[#allocation4 + $0x6] sm:$0x1] %vm373, %v491
          %v494 = vld [vmem:[#allocation3] sm:$0x1]
          %v496 = vlaneseq
          %v497 = vshrl.u32 %v496, 7
          %v498 = vsub.s32 0, %v497
          %v499 = vrot.slane %v494, %v498
          %500 = vrot.lane.b32.xlu0 %v499, 48
          %v501 = vpop.permute.xlu0 %500
          %503 = vst.msk [vmem:[#allocation4 + $0x6] sm:$0x1] %vm384, %v501
          %v504 = vld [vmem:[#allocation2] sm:$0x1]
          %v505 = vmul.f32 %v504, 0.03125
          %v507 = vlaneseq
          %v508 = vshrl.u32 %v507, 7
          %v509 = vsub.s32 0, %v508
          %v510 = vrot.slane %v505, %v509
          %511 = vrot.lane.b32.xlu0 %v510, 16
          %v512 = vpop.permute.xlu0 %511
          %514 = vst.msk [vmem:[#allocation4 + $0x7] sm:$0x1] %vm373, %v512
          %v515 = vld [vmem:[#allocation3] sm:$0x1]
          %v517 = vlaneseq
          %v518 = vshrl.u32 %v517, 7
          %v519 = vsub.s32 0, %v518
          %v520 = vrot.slane %v515, %v519
          %521 = vrot.lane.b32.xlu0 %v520, 32
          %v522 = vpop.permute.xlu0 %521
          %524 = vst.msk [vmem:[#allocation4 + $0x7] sm:$0x1] %vm384, %v522
          %v525 = vld [vmem:[#allocation2 + $0x1] sm:$0x1]
          %v526 = vmul.f32 %v525, 0.03125
          %527 = vst.msk [vmem:[#allocation4 + $0x8] sm:$0x1] %vm373, %v526
          %v528 = vld [vmem:[#allocation3 + $0x1] sm:$0x1]
          %v530 = vlaneseq
          %v531 = vshrl.u32 %v530, 7
          %v532 = vsub.s32 0, %v531
          %v533 = vrot.slane %v528, %v532
          %534 = vrot.lane.b32.xlu0 %v533, 16
          %v535 = vpop.permute.xlu0 %534
          %537 = vst.msk [vmem:[#allocation4 + $0x8] sm:$0x1] %vm384, %v535
          %v538 = vld [vmem:[#allocation2 + $0x1] sm:$0x1]
          %v539 = vmul.f32 %v538, 0.03125
          %v541 = vlaneseq
          %v542 = vshrl.u32 %v541, 7
          %v543 = vsub.s32 0, %v542
          %v544 = vrot.slane %v539, %v543
          %545 = vrot.lane.b32.xlu0 %v544, 112
          %v546 = vpop.permute.xlu0 %545
          %548 = vst.msk [vmem:[#allocation4 + $0x9] sm:$0x1] %vm373, %v546
          %v549 = vld [vmem:[#allocation3 + $0x1] sm:$0x1]
          %550 = vst.msk [vmem:[#allocation4 + $0x9] sm:$0x1] %vm384, %v549
          %v551 = vld [vmem:[#allocation2 + $0x1] sm:$0x1]
          %v552 = vmul.f32 %v551, 0.03125
          %v554 = vlaneseq
          %v555 = vshrl.u32 %v554, 7
          %v556 = vsub.s32 0, %v555
          %v557 = vrot.slane %v552, %v556
          %558 = vrot.lane.b32.xlu0 %v557, 96
          %v559 = vpop.permute.xlu0 %558
          %561 = vst.msk [vmem:[#allocation4 + $0xa] sm:$0x1] %vm373, %v559
          %v562 = vld [vmem:[#allocation3 + $0x1] sm:$0x1]
          %v564 = vlaneseq
          %v565 = vshrl.u32 %v564, 7
          %v566 = vsub.s32 0, %v565
          %v567 = vrot.slane %v562, %v566
          %568 = vrot.lane.b32.xlu0 %v567, 112
          %v569 = vpop.permute.xlu0 %568
          %571 = vst.msk [vmem:[#allocation4 + $0xa] sm:$0x1] %vm384, %v569
          %v572 = vld [vmem:[#allocation2 + $0x1] sm:$0x1]
          %v573 = vmul.f32 %v572, 0.03125
          %v575 = vlaneseq
          %v576 = vshrl.u32 %v575, 7
          %v577 = vsub.s32 0, %v576
          %v578 = vrot.slane %v573, %v577
          %579 = vrot.lane.b32.xlu0 %v578, 80
          %v580 = vpop.permute.xlu0 %579
          %582 = vst.msk [vmem:[#allocation4 + $0xb] sm:$0x1] %vm373, %v580
          %v583 = vld [vmem:[#allocation3 + $0x1] sm:$0x1]
          %v585 = vlaneseq
          %v586 = vshrl.u32 %v585, 7
          %v587 = vsub.s32 0, %v586
          %v588 = vrot.slane %v583, %v587
          %589 = vrot.lane.b32.xlu0 %v588, 96
          %v590 = vpop.permute.xlu0 %589
          %592 = vst.msk [vmem:[#allocation4 + $0xb] sm:$0x1] %vm384, %v590
          %v593 = vld [vmem:[#allocation2 + $0x1] sm:$0x1]
          %v594 = vmul.f32 %v593, 0.03125
          %v596 = vlaneseq
          %v597 = vshrl.u32 %v596, 7
          %v598 = vsub.s32 0, %v597
          %v599 = vrot.slane %v594, %v598
          %600 = vrot.lane.b32.xlu0 %v599, 64
          %v601 = vpop.permute.xlu0 %600
          %603 = vst.msk [vmem:[#allocation4 + $0xc] sm:$0x1] %vm373, %v601
          %v604 = vld [vmem:[#allocation3 + $0x1] sm:$0x1]
          %v606 = vlaneseq
          %v607 = vshrl.u32 %v606, 7
          %v608 = vsub.s32 0, %v607
          %v609 = vrot.slane %v604, %v608
          %610 = vrot.lane.b32.xlu0 %v609, 80
          %v611 = vpop.permute.xlu0 %610
          %613 = vst.msk [vmem:[#allocation4 + $0xc] sm:$0x1] %vm384, %v611
          %v614 = vld [vmem:[#allocation2 + $0x1] sm:$0x1]
          %v615 = vmul.f32 %v614, 0.03125
          %v617 = vlaneseq
          %v618 = vshrl.u32 %v617, 7
          %v619 = vsub.s32 0, %v618
          %v620 = vrot.slane %v615, %v619
          %621 = vrot.lane.b32.xlu0 %v620, 48
          %v622 = vpop.permute.xlu0 %621
          %624 = vst.msk [vmem:[#allocation4 + $0xd] sm:$0x1] %vm373, %v622
          %v625 = vld [vmem:[#allocation3 + $0x1] sm:$0x1]
          %v627 = vlaneseq
          %v628 = vshrl.u32 %v627, 7
          %v629 = vsub.s32 0, %v628
          %v630 = vrot.slane %v625, %v629
          %631 = vrot.lane.b32.xlu0 %v630, 64
          %v632 = vpop.permute.xlu0 %631
          %634 = vst.msk [vmem:[#allocation4 + $0xd] sm:$0x1] %vm384, %v632
          %v635 = vld [vmem:[#allocation2 + $0x1] sm:$0x1]
          %v636 = vmul.f32 %v635, 0.03125
          %v638 = vlaneseq
          %v639 = vshrl.u32 %v638, 7
          %v640 = vsub.s32 0, %v639
          %v641 = vrot.slane %v636, %v640
          %642 = vrot.lane.b32.xlu0 %v641, 32
          %v643 = vpop.permute.xlu0 %642
          %645 = vst.msk [vmem:[#allocation4 + $0xe] sm:$0x1] %vm373, %v643
          %v646 = vld [vmem:[#allocation3 + $0x1] sm:$0x1]
          %v648 = vlaneseq
          %v649 = vshrl.u32 %v648, 7
          %v650 = vsub.s32 0, %v649
          %v651 = vrot.slane %v646, %v650
          %652 = vrot.lane.b32.xlu0 %v651, 48
          %v653 = vpop.permute.xlu0 %652
          %655 = vst.msk [vmem:[#allocation4 + $0xe] sm:$0x1] %vm384, %v653
          %v656 = vld [vmem:[#allocation2 + $0x1] sm:$0x1]
          %v657 = vmul.f32 %v656, 0.03125
          %v659 = vlaneseq
          %v660 = vshrl.u32 %v659, 7
          %v661 = vsub.s32 0, %v660
          %v662 = vrot.slane %v657, %v661
          %663 = vrot.lane.b32.xlu0 %v662, 16
          %v664 = vpop.permute.xlu0 %663
          %666 = vst.msk [vmem:[#allocation4 + $0xf] sm:$0x1] %vm373, %v664
          %v667 = vld [vmem:[#allocation3 + $0x1] sm:$0x1]
          %v669 = vlaneseq
          %v670 = vshrl.u32 %v669, 7
          %v671 = vsub.s32 0, %v670
          %v672 = vrot.slane %v667, %v671
          %673 = vrot.lane.b32.xlu0 %v672, 32
          %v674 = vpop.permute.xlu0 %673
          %676 = vst.msk [vmem:[#allocation4 + $0xf] sm:$0x1] %vm384, %v674
          %v677 = vld [vmem:[#allocation4] sm:$0xff]
          %v678 = vld [vmem:[#allocation4 + $0x8] sm:$0xff]
          %v679 = vld [vmem:[%s1] sm:$0xff]
          %v680 = vld [vmem:[%s1 + $0x8] sm:$0xff]
          %v681 = vld [vmem:[%s1 + $0x10] sm:$0xff]
          %v682 = vld [vmem:[%s1 + $0x18] sm:$0xff]
          %vm683 = vcmask 261120
          %v685 = vsel %vm683, %v677, 0
          %v688 = vsel %vm683, %v678, 0
          %690 = vmatprep.subr.mxu0 0.0
          %691 = vmatpush1.msra.mxu0 0.0
          %692 = vmatprep.subr.mxu0 0.0
          %693 = vmatpush1.msra.mxu0 0.0
          %694 = vmatprep.subr.mxu0 0.0
          %695 = vmatpush1.msra.mxu0 0.0
          %696 = vmatprep.subr.mxu0 0.0
          %697 = vmatpush1.msra.mxu0 0.0
          %698 = vmatprep.subr.mxu0 0.0
          %699 = vmatpush1.msra.mxu0 0.0
          %700 = vmatprep.subr.mxu0 0.0
          %701 = vmatpush1.msra.mxu0 0.0
          %702 = vmatprep.subr.mxu0 0.0
          %703 = vmatpush1.msra.mxu0 0.0
          %704 = vmatprep.subr.mxu0 0.0
          %705 = vmatpush1.msra.mxu0 0.0
          %706 = vmatprep.subr.mxu0 0.0
          %707 = vmatpush1.msra.mxu0 0.0
          %708 = vmatprep.subr.mxu0 0.0
          %709 = vmatpush1.msra.mxu0 0.0
          %710 = vmatprep.subr.mxu0 0.0
          %711 = vmatpush1.msra.mxu0 0.0
          %712 = vmatprep.subr.mxu0 0.0
          %713 = vmatpush1.msra.mxu0 0.0
          %714 = vmatprep.subr.mxu0 0.0
          %715 = vmatpush1.msra.mxu0 %v682
          %716 = vmatprep.subr.mxu0 0.0
          %717 = vmatpush1.msra.mxu0 %v681
          %718 = vmatprep.subr.mxu0 0.0
          %719 = vmatpush1.msra.mxu0 %v680
          %720 = vmatprep.subr.mxu0 0.0
          %721 = vmatpush1.msra.mxu0 %v679
          %722 = vmatprep.subr.mxu0 0.0
          %723 = vmatpush2.msra.mxu0 0.0
          %724 = vmatprep.subr.mxu0 0.0
          %725 = vmatpush2.msra.mxu0 0.0
          %726 = vmatprep.subr.mxu0 0.0
          %727 = vmatpush2.msra.mxu0 0.0
          %728 = vmatprep.subr.mxu0 0.0
          %729 = vmatpush2.msra.mxu0 0.0
          %730 = vmatprep.subr.mxu0 0.0
          %731 = vmatpush2.msra.mxu0 0.0
          %732 = vmatprep.subr.mxu0 0.0
          %733 = vmatpush2.msra.mxu0 0.0
          %734 = vmatprep.subr.mxu0 0.0
          %735 = vmatpush2.msra.mxu0 0.0
          %736 = vmatprep.subr.mxu0 0.0
          %737 = vmatpush2.msra.mxu0 0.0
          %738 = vmatprep.subr.mxu0 0.0
          %739 = vmatpush2.msra.mxu0 0.0
          %740 = vmatprep.subr.mxu0 0.0
          %741 = vmatpush2.msra.mxu0 0.0
          %742 = vmatprep.subr.mxu0 0.0
          %743 = vmatpush2.msra.mxu0 0.0
          %744 = vmatprep.subr.mxu0 0.0
          %745 = vmatpush2.msra.mxu0 0.0
          %746 = vmatprep.subr.mxu0 0.0
          %747 = vmatpush2.msra.mxu0 0.0
          %748 = vmatprep.subr.mxu0 0.0
          %749 = vmatpush2.msra.mxu0 0.0
          %750 = vmatprep.subr.mxu0 0.0
          %751 = vmatpush2.msra.mxu0 0.0
          %752 = vmatprep.subr.mxu0 0.0
          %753 = vmatpush2.msra.mxu0 0.0
          %754 = vmatprep.mubr.f32.mxu0 0.0
          %755 = vmatmul.mubr.f32.gmra.mxu0 %v685
          %v756 = vpop.f32.mrf.mxu0
          %v757 = vadd.f32 0.0, %v756
          %v758 = vpop.f32.mrf.mxu0
          %759 = vmatprep.mubr.f32.mxu0 0.0
          %760 = vmatmul.mubr.f32.gmra.mxu0 %v688
          %v761 = vpop.f32.mrf.mxu0
          %v762 = vadd.f32 0.0, %v761
          %v763 = vpop.f32.mrf.mxu0
          %764 = vdwg.mxu0
          %vm765 = vcmask 130048
          %766 = vst.msk [vmem:[#allocation5] sm:$0xff] %vm765, %v757
          %767 = vst.msk [vmem:[#allocation5 + $0x8] sm:$0xff] %vm765, %v762
          %s768 = scalar_lea.vmem %s1, 32
          %v769 = vld [vmem:[%s768] sm:$0xff]
          %v770 = vld [vmem:[%s768 + $0x8] sm:$0xff]
          %v771 = vld [vmem:[%s768 + $0x10] sm:$0xff]
          %v772 = vld [vmem:[%s768 + $0x18] sm:$0xff]
          %773 = vmatprep.subr.mxu0 0.0
          %774 = vmatpush1.msra.mxu0 0.0
          %775 = vmatprep.subr.mxu0 0.0
          %776 = vmatpush1.msra.mxu0 0.0
          %777 = vmatprep.subr.mxu0 0.0
          %778 = vmatpush1.msra.mxu0 0.0
          %779 = vmatprep.subr.mxu0 0.0
          %780 = vmatpush1.msra.mxu0 0.0
          %781 = vmatprep.subr.mxu0 0.0
          %782 = vmatpush1.msra.mxu0 0.0
          %783 = vmatprep.subr.mxu0 0.0
          %784 = vmatpush1.msra.mxu0 0.0
          %785 = vmatprep.subr.mxu0 0.0
          %786 = vmatpush1.msra.mxu0 0.0
          %787 = vmatprep.subr.mxu0 0.0
          %788 = vmatpush1.msra.mxu0 0.0
          %789 = vmatprep.subr.mxu0 0.0
          %790 = vmatpush1.msra.mxu0 0.0
          %791 = vmatprep.subr.mxu0 0.0
          %792 = vmatpush1.msra.mxu0 0.0
          %793 = vmatprep.subr.mxu0 0.0
          %794 = vmatpush1.msra.mxu0 0.0
          %795 = vmatprep.subr.mxu0 0.0
          %796 = vmatpush1.msra.mxu0 0.0
          %797 = vmatprep.subr.mxu0 0.0
          %798 = vmatpush1.msra.mxu0 %v772
          %799 = vmatprep.subr.mxu0 0.0
          %800 = vmatpush1.msra.mxu0 %v771
          %801 = vmatprep.subr.mxu0 0.0
          %802 = vmatpush1.msra.mxu0 %v770
          %803 = vmatprep.subr.mxu0 0.0
          %804 = vmatpush1.msra.mxu0 %v769
          %805 = vmatprep.subr.mxu0 0.0
          %806 = vmatpush2.msra.mxu0 0.0
          %807 = vmatprep.subr.mxu0 0.0
          %808 = vmatpush2.msra.mxu0 0.0
          %809 = vmatprep.subr.mxu0 0.0
          %810 = vmatpush2.msra.mxu0 0.0
          %811 = vmatprep.subr.mxu0 0.0
          %812 = vmatpush2.msra.mxu0 0.0
          %813 = vmatprep.subr.mxu0 0.0
          %814 = vmatpush2.msra.mxu0 0.0
          %815 = vmatprep.subr.mxu0 0.0
          %816 = vmatpush2.msra.mxu0 0.0
          %817 = vmatprep.subr.mxu0 0.0
          %818 = vmatpush2.msra.mxu0 0.0
          %819 = vmatprep.subr.mxu0 0.0
          %820 = vmatpush2.msra.mxu0 0.0
          %821 = vmatprep.subr.mxu0 0.0
          %822 = vmatpush2.msra.mxu0 0.0
          %823 = vmatprep.subr.mxu0 0.0
          %824 = vmatpush2.msra.mxu0 0.0
          %825 = vmatprep.subr.mxu0 0.0
          %826 = vmatpush2.msra.mxu0 0.0
          %827 = vmatprep.subr.mxu0 0.0
          %828 = vmatpush2.msra.mxu0 0.0
          %829 = vmatprep.subr.mxu0 0.0
          %830 = vmatpush2.msra.mxu0 0.0
          %831 = vmatprep.subr.mxu0 0.0
          %832 = vmatpush2.msra.mxu0 0.0
          %833 = vmatprep.subr.mxu0 0.0
          %834 = vmatpush2.msra.mxu0 0.0
          %835 = vmatprep.subr.mxu0 0.0
          %836 = vmatpush2.msra.mxu0 0.0
          %837 = vmatprep.mubr.f32.mxu0 0.0
          %838 = vmatmul.mubr.f32.gmra.mxu0 %v685
          %v839 = vpop.f32.mrf.mxu0
          %v840 = vadd.f32 0.0, %v839
          %v841 = vpop.f32.mrf.mxu0
          %842 = vmatprep.mubr.f32.mxu0 0.0
          %843 = vmatmul.mubr.f32.gmra.mxu0 %v688
          %v844 = vpop.f32.mrf.mxu0
          %v845 = vadd.f32 0.0, %v844
          %v846 = vpop.f32.mrf.mxu0
          %847 = vdwg.mxu0
          %848 = vst.msk [vmem:[#allocation5 + $0x10] sm:$0xff] %vm765, %v840
          %849 = vst.msk [vmem:[#allocation5 + $0x18] sm:$0xff] %vm765, %v845
          %s850 = scalar_lea.vmem %s1, 64
          %v851 = vld [vmem:[%s850] sm:$0xff]
          %v852 = vld [vmem:[%s850 + $0x8] sm:$0xff]
          %v853 = vld [vmem:[%s850 + $0x10] sm:$0xff]
          %v854 = vld [vmem:[%s850 + $0x18] sm:$0xff]
          %855 = vmatprep.subr.mxu0 0.0
          %856 = vmatpush1.msra.mxu0 0.0
          %857 = vmatprep.subr.mxu0 0.0
          %858 = vmatpush1.msra.mxu0 0.0
          %859 = vmatprep.subr.mxu0 0.0
          %860 = vmatpush1.msra.mxu0 0.0
          %861 = vmatprep.subr.mxu0 0.0
          %862 = vmatpush1.msra.mxu0 0.0
          %863 = vmatprep.subr.mxu0 0.0
          %864 = vmatpush1.msra.mxu0 0.0
          %865 = vmatprep.subr.mxu0 0.0
          %866 = vmatpush1.msra.mxu0 0.0
          %867 = vmatprep.subr.mxu0 0.0
          %868 = vmatpush1.msra.mxu0 0.0
          %869 = vmatprep.subr.mxu0 0.0
          %870 = vmatpush1.msra.mxu0 0.0
          %871 = vmatprep.subr.mxu0 0.0
          %872 = vmatpush1.msra.mxu0 0.0
          %873 = vmatprep.subr.mxu0 0.0
          %874 = vmatpush1.msra.mxu0 0.0
          %875 = vmatprep.subr.mxu0 0.0
          %876 = vmatpush1.msra.mxu0 0.0
          %877 = vmatprep.subr.mxu0 0.0
          %878 = vmatpush1.msra.mxu0 0.0
          %879 = vmatprep.subr.mxu0 0.0
          %880 = vmatpush1.msra.mxu0 %v854
          %881 = vmatprep.subr.mxu0 0.0
          %882 = vmatpush1.msra.mxu0 %v853
          %883 = vmatprep.subr.mxu0 0.0
          %884 = vmatpush1.msra.mxu0 %v852
          %885 = vmatprep.subr.mxu0 0.0
          %886 = vmatpush1.msra.mxu0 %v851
          %887 = vmatprep.subr.mxu0 0.0
          %888 = vmatpush2.msra.mxu0 0.0
          %889 = vmatprep.subr.mxu0 0.0
          %890 = vmatpush2.msra.mxu0 0.0
          %891 = vmatprep.subr.mxu0 0.0
          %892 = vmatpush2.msra.mxu0 0.0
          %893 = vmatprep.subr.mxu0 0.0
          %894 = vmatpush2.msra.mxu0 0.0
          %895 = vmatprep.subr.mxu0 0.0
          %896 = vmatpush2.msra.mxu0 0.0
          %897 = vmatprep.subr.mxu0 0.0
          %898 = vmatpush2.msra.mxu0 0.0
          %899 = vmatprep.subr.mxu0 0.0
          %900 = vmatpush2.msra.mxu0 0.0
          %901 = vmatprep.subr.mxu0 0.0
          %902 = vmatpush2.msra.mxu0 0.0
          %903 = vmatprep.subr.mxu0 0.0
          %904 = vmatpush2.msra.mxu0 0.0
          %905 = vmatprep.subr.mxu0 0.0
          %906 = vmatpush2.msra.mxu0 0.0
          %907 = vmatprep.subr.mxu0 0.0
          %908 = vmatpush2.msra.mxu0 0.0
          %909 = vmatprep.subr.mxu0 0.0
          %910 = vmatpush2.msra.mxu0 0.0
          %911 = vmatprep.subr.mxu0 0.0
          %912 = vmatpush2.msra.mxu0 0.0
          %913 = vmatprep.subr.mxu0 0.0
          %914 = vmatpush2.msra.mxu0 0.0
          %915 = vmatprep.subr.mxu0 0.0
          %916 = vmatpush2.msra.mxu0 0.0
          %917 = vmatprep.subr.mxu0 0.0
          %918 = vmatpush2.msra.mxu0 0.0
          %919 = vmatprep.mubr.f32.mxu0 0.0
          %920 = vmatmul.mubr.f32.gmra.mxu0 %v685
          %v921 = vpop.f32.mrf.mxu0
          %v922 = vadd.f32 0.0, %v921
          %v923 = vpop.f32.mrf.mxu0
          %924 = vmatprep.mubr.f32.mxu0 0.0
          %925 = vmatmul.mubr.f32.gmra.mxu0 %v688
          %v926 = vpop.f32.mrf.mxu0
          %v927 = vadd.f32 0.0, %v926
          %v928 = vpop.f32.mrf.mxu0
          %929 = vdwg.mxu0
          %930 = vst.msk [vmem:[#allocation5 + $0x20] sm:$0xff] %vm765, %v922
          %931 = vst.msk [vmem:[#allocation5 + $0x28] sm:$0xff] %vm765, %v927
          %s932 = scalar_lea.vmem %s1, 96
          %v933 = vld [vmem:[%s932] sm:$0xff]
          %v934 = vld [vmem:[%s932 + $0x8] sm:$0xff]
          %v935 = vld [vmem:[%s932 + $0x10] sm:$0xff]
          %v936 = vld [vmem:[%s932 + $0x18] sm:$0xff]
          %937 = vmatprep.subr.mxu0 0.0
          %938 = vmatpush1.msra.mxu0 0.0
          %939 = vmatprep.subr.mxu0 0.0
          %940 = vmatpush1.msra.mxu0 0.0
          %941 = vmatprep.subr.mxu0 0.0
          %942 = vmatpush1.msra.mxu0 0.0
          %943 = vmatprep.subr.mxu0 0.0
          %944 = vmatpush1.msra.mxu0 0.0
          %945 = vmatprep.subr.mxu0 0.0
          %946 = vmatpush1.msra.mxu0 0.0
          %947 = vmatprep.subr.mxu0 0.0
          %948 = vmatpush1.msra.mxu0 0.0
          %949 = vmatprep.subr.mxu0 0.0
          %950 = vmatpush1.msra.mxu0 0.0
          %951 = vmatprep.subr.mxu0 0.0
          %952 = vmatpush1.msra.mxu0 0.0
          %953 = vmatprep.subr.mxu0 0.0
          %954 = vmatpush1.msra.mxu0 0.0
          %955 = vmatprep.subr.mxu0 0.0
          %956 = vmatpush1.msra.mxu0 0.0
          %957 = vmatprep.subr.mxu0 0.0
          %958 = vmatpush1.msra.mxu0 0.0
          %959 = vmatprep.subr.mxu0 0.0
          %960 = vmatpush1.msra.mxu0 0.0
          %961 = vmatprep.subr.mxu0 0.0
          %962 = vmatpush1.msra.mxu0 %v936
          %963 = vmatprep.subr.mxu0 0.0
          %964 = vmatpush1.msra.mxu0 %v935
          %965 = vmatprep.subr.mxu0 0.0
          %966 = vmatpush1.msra.mxu0 %v934
          %967 = vmatprep.subr.mxu0 0.0
          %968 = vmatpush1.msra.mxu0 %v933
          %969 = vmatprep.subr.mxu0 0.0
          %970 = vmatpush2.msra.mxu0 0.0
          %971 = vmatprep.subr.mxu0 0.0
          %972 = vmatpush2.msra.mxu0 0.0
          %973 = vmatprep.subr.mxu0 0.0
          %974 = vmatpush2.msra.mxu0 0.0
          %975 = vmatprep.subr.mxu0 0.0
          %976 = vmatpush2.msra.mxu0 0.0
          %977 = vmatprep.subr.mxu0 0.0
          %978 = vmatpush2.msra.mxu0 0.0
          %979 = vmatprep.subr.mxu0 0.0
          %980 = vmatpush2.msra.mxu0 0.0
          %981 = vmatprep.subr.mxu0 0.0
          %982 = vmatpush2.msra.mxu0 0.0
          %983 = vmatprep.subr.mxu0 0.0
          %984 = vmatpush2.msra.mxu0 0.0
          %985 = vmatprep.subr.mxu0 0.0
          %986 = vmatpush2.msra.mxu0 0.0
          %987 = vmatprep.subr.mxu0 0.0
          %988 = vmatpush2.msra.mxu0 0.0
          %989 = vmatprep.subr.mxu0 0.0
          %990 = vmatpush2.msra.mxu0 0.0
          %991 = vmatprep.subr.mxu0 0.0
          %992 = vmatpush2.msra.mxu0 0.0
          %993 = vmatprep.subr.mxu0 0.0
          %994 = vmatpush2.msra.mxu0 0.0
          %995 = vmatprep.subr.mxu0 0.0
          %996 = vmatpush2.msra.mxu0 0.0
          %997 = vmatprep.subr.mxu0 0.0
          %998 = vmatpush2.msra.mxu0 0.0
          %999 = vmatprep.subr.mxu0 0.0
          %1000 = vmatpush2.msra.mxu0 0.0
          %1001 = vmatprep.mubr.f32.mxu0 0.0
          %1002 = vmatmul.mubr.f32.gmra.mxu0 %v685
          %v1003 = vpop.f32.mrf.mxu0
          %v1004 = vadd.f32 0.0, %v1003
          %v1005 = vpop.f32.mrf.mxu0
          %1006 = vmatprep.mubr.f32.mxu0 0.0
          %1007 = vmatmul.mubr.f32.gmra.mxu0 %v688
          %v1008 = vpop.f32.mrf.mxu0
          %v1009 = vadd.f32 0.0, %v1008
          %v1010 = vpop.f32.mrf.mxu0
          %1011 = vdwg.mxu0
          %1012 = vst.msk [vmem:[#allocation5 + $0x30] sm:$0xff] %vm765, %v1004
          %1013 = vst.msk [vmem:[#allocation5 + $0x38] sm:$0xff] %vm765, %v1009
          %s1014 = scalar_lea.vmem %s1, 128
          %v1015 = vld [vmem:[%s1014] sm:$0xff]
          %v1016 = vld [vmem:[%s1014 + $0x8] sm:$0xff]
          %v1017 = vld [vmem:[%s1014 + $0x10] sm:$0xff]
          %v1018 = vld [vmem:[%s1014 + $0x18] sm:$0xff]
          %1019 = vmatprep.subr.mxu0 0.0
          %1020 = vmatpush1.msra.mxu0 0.0
          %1021 = vmatprep.subr.mxu0 0.0
          %1022 = vmatpush1.msra.mxu0 0.0
          %1023 = vmatprep.subr.mxu0 0.0
          %1024 = vmatpush1.msra.mxu0 0.0
          %1025 = vmatprep.subr.mxu0 0.0
          %1026 = vmatpush1.msra.mxu0 0.0
          %1027 = vmatprep.subr.mxu0 0.0
          %1028 = vmatpush1.msra.mxu0 0.0
          %1029 = vmatprep.subr.mxu0 0.0
          %1030 = vmatpush1.msra.mxu0 0.0
          %1031 = vmatprep.subr.mxu0 0.0
          %1032 = vmatpush1.msra.mxu0 0.0
          %1033 = vmatprep.subr.mxu0 0.0
          %1034 = vmatpush1.msra.mxu0 0.0
          %1035 = vmatprep.subr.mxu0 0.0
          %1036 = vmatpush1.msra.mxu0 0.0
          %1037 = vmatprep.subr.mxu0 0.0
          %1038 = vmatpush1.msra.mxu0 0.0
          %1039 = vmatprep.subr.mxu0 0.0
          %1040 = vmatpush1.msra.mxu0 0.0
          %1041 = vmatprep.subr.mxu0 0.0
          %1042 = vmatpush1.msra.mxu0 0.0
          %1043 = vmatprep.subr.mxu0 0.0
          %1044 = vmatpush1.msra.mxu0 %v1018
          %1045 = vmatprep.subr.mxu0 0.0
          %1046 = vmatpush1.msra.mxu0 %v1017
          %1047 = vmatprep.subr.mxu0 0.0
          %1048 = vmatpush1.msra.mxu0 %v1016
          %1049 = vmatprep.subr.mxu0 0.0
          %1050 = vmatpush1.msra.mxu0 %v1015
          %1051 = vmatprep.subr.mxu0 0.0
          %1052 = vmatpush2.msra.mxu0 0.0
          %1053 = vmatprep.subr.mxu0 0.0
          %1054 = vmatpush2.msra.mxu0 0.0
          %1055 = vmatprep.subr.mxu0 0.0
          %1056 = vmatpush2.msra.mxu0 0.0
          %1057 = vmatprep.subr.mxu0 0.0
          %1058 = vmatpush2.msra.mxu0 0.0
          %1059 = vmatprep.subr.mxu0 0.0
          %1060 = vmatpush2.msra.mxu0 0.0
          %1061 = vmatprep.subr.mxu0 0.0
          %1062 = vmatpush2.msra.mxu0 0.0
          %1063 = vmatprep.subr.mxu0 0.0
          %1064 = vmatpush2.msra.mxu0 0.0
          %1065 = vmatprep.subr.mxu0 0.0
          %1066 = vmatpush2.msra.mxu0 0.0
          %1067 = vmatprep.subr.mxu0 0.0
          %1068 = vmatpush2.msra.mxu0 0.0
          %1069 = vmatprep.subr.mxu0 0.0
          %1070 = vmatpush2.msra.mxu0 0.0
          %1071 = vmatprep.subr.mxu0 0.0
          %1072 = vmatpush2.msra.mxu0 0.0
          %1073 = vmatprep.subr.mxu0 0.0
          %1074 = vmatpush2.msra.mxu0 0.0
          %1075 = vmatprep.subr.mxu0 0.0
          %1076 = vmatpush2.msra.mxu0 0.0
          %1077 = vmatprep.subr.mxu0 0.0
          %1078 = vmatpush2.msra.mxu0 0.0
          %1079 = vmatprep.subr.mxu0 0.0
          %1080 = vmatpush2.msra.mxu0 0.0
          %1081 = vmatprep.subr.mxu0 0.0
          %1082 = vmatpush2.msra.mxu0 0.0
          %1083 = vmatprep.mubr.f32.mxu0 0.0
          %1084 = vmatmul.mubr.f32.gmra.mxu0 %v685
          %v1085 = vpop.f32.mrf.mxu0
          %v1086 = vadd.f32 0.0, %v1085
          %v1087 = vpop.f32.mrf.mxu0
          %1088 = vmatprep.mubr.f32.mxu0 0.0
          %1089 = vmatmul.mubr.f32.gmra.mxu0 %v688
          %v1090 = vpop.f32.mrf.mxu0
          %v1091 = vadd.f32 0.0, %v1090
          %v1092 = vpop.f32.mrf.mxu0
          %1093 = vdwg.mxu0
          %1094 = vst.msk [vmem:[#allocation5 + $0x40] sm:$0xff] %vm765, %v1086
          %1095 = vst.msk [vmem:[#allocation5 + $0x48] sm:$0xff] %vm765, %v1091
          %s1096 = scalar_lea.vmem %s1, 160
          %v1097 = vld [vmem:[%s1096] sm:$0xff]
          %v1098 = vld [vmem:[%s1096 + $0x8] sm:$0xff]
          %v1099 = vld [vmem:[%s1096 + $0x10] sm:$0xff]
          %v1100 = vld [vmem:[%s1096 + $0x18] sm:$0xff]
          %1101 = vmatprep.subr.mxu0 0.0
          %1102 = vmatpush1.msra.mxu0 0.0
          %1103 = vmatprep.subr.mxu0 0.0
          %1104 = vmatpush1.msra.mxu0 0.0
          %1105 = vmatprep.subr.mxu0 0.0
          %1106 = vmatpush1.msra.mxu0 0.0
          %1107 = vmatprep.subr.mxu0 0.0
          %1108 = vmatpush1.msra.mxu0 0.0
          %1109 = vmatprep.subr.mxu0 0.0
          %1110 = vmatpush1.msra.mxu0 0.0
          %1111 = vmatprep.subr.mxu0 0.0
          %1112 = vmatpush1.msra.mxu0 0.0
          %1113 = vmatprep.subr.mxu0 0.0
          %1114 = vmatpush1.msra.mxu0 0.0
          %1115 = vmatprep.subr.mxu0 0.0
          %1116 = vmatpush1.msra.mxu0 0.0
          %1117 = vmatprep.subr.mxu0 0.0
          %1118 = vmatpush1.msra.mxu0 0.0
          %1119 = vmatprep.subr.mxu0 0.0
          %1120 = vmatpush1.msra.mxu0 0.0
          %1121 = vmatprep.subr.mxu0 0.0
          %1122 = vmatpush1.msra.mxu0 0.0
          %1123 = vmatprep.subr.mxu0 0.0
          %1124 = vmatpush1.msra.mxu0 0.0
          %1125 = vmatprep.subr.mxu0 0.0
          %1126 = vmatpush1.msra.mxu0 %v1100
          %1127 = vmatprep.subr.mxu0 0.0
          %1128 = vmatpush1.msra.mxu0 %v1099
          %1129 = vmatprep.subr.mxu0 0.0
          %1130 = vmatpush1.msra.mxu0 %v1098
          %1131 = vmatprep.subr.mxu0 0.0
          %1132 = vmatpush1.msra.mxu0 %v1097
          %1133 = vmatprep.subr.mxu0 0.0
          %1134 = vmatpush2.msra.mxu0 0.0
          %1135 = vmatprep.subr.mxu0 0.0
          %1136 = vmatpush2.msra.mxu0 0.0
          %1137 = vmatprep.subr.mxu0 0.0
          %1138 = vmatpush2.msra.mxu0 0.0
          %1139 = vmatprep.subr.mxu0 0.0
          %1140 = vmatpush2.msra.mxu0 0.0
          %1141 = vmatprep.subr.mxu0 0.0
          %1142 = vmatpush2.msra.mxu0 0.0
          %1143 = vmatprep.subr.mxu0 0.0
          %1144 = vmatpush2.msra.mxu0 0.0
          %1145 = vmatprep.subr.mxu0 0.0
          %1146 = vmatpush2.msra.mxu0 0.0
          %1147 = vmatprep.subr.mxu0 0.0
          %1148 = vmatpush2.msra.mxu0 0.0
          %1149 = vmatprep.subr.mxu0 0.0
          %1150 = vmatpush2.msra.mxu0 0.0
          %1151 = vmatprep.subr.mxu0 0.0
          %1152 = vmatpush2.msra.mxu0 0.0
          %1153 = vmatprep.subr.mxu0 0.0
          %1154 = vmatpush2.msra.mxu0 0.0
          %1155 = vmatprep.subr.mxu0 0.0
          %1156 = vmatpush2.msra.mxu0 0.0
          %1157 = vmatprep.subr.mxu0 0.0
          %1158 = vmatpush2.msra.mxu0 0.0
          %1159 = vmatprep.subr.mxu0 0.0
          %1160 = vmatpush2.msra.mxu0 0.0
          %1161 = vmatprep.subr.mxu0 0.0
          %1162 = vmatpush2.msra.mxu0 0.0
          %1163 = vmatprep.subr.mxu0 0.0
          %1164 = vmatpush2.msra.mxu0 0.0
          %1165 = vmatprep.mubr.f32.mxu0 0.0
          %1166 = vmatmul.mubr.f32.gmra.mxu0 %v685
          %v1167 = vpop.f32.mrf.mxu0
          %v1168 = vadd.f32 0.0, %v1167
          %v1169 = vpop.f32.mrf.mxu0
          %1170 = vmatprep.mubr.f32.mxu0 0.0
          %1171 = vmatmul.mubr.f32.gmra.mxu0 %v688
          %v1172 = vpop.f32.mrf.mxu0
          %v1173 = vadd.f32 0.0, %v1172
          %v1174 = vpop.f32.mrf.mxu0
          %1175 = vdwg.mxu0
          %1176 = vst.msk [vmem:[#allocation5 + $0x50] sm:$0xff] %vm765, %v1168
          %1177 = vst.msk [vmem:[#allocation5 + $0x58] sm:$0xff] %vm765, %v1173
          %s1178 = scalar_lea.vmem %s1, 192
          %v1179 = vld [vmem:[%s1178] sm:$0xff]
          %v1180 = vld [vmem:[%s1178 + $0x8] sm:$0xff]
          %v1181 = vld [vmem:[%s1178 + $0x10] sm:$0xff]
          %v1182 = vld [vmem:[%s1178 + $0x18] sm:$0xff]
          %1183 = vmatprep.subr.mxu0 0.0
          %1184 = vmatpush1.msra.mxu0 0.0
          %1185 = vmatprep.subr.mxu0 0.0
          %1186 = vmatpush1.msra.mxu0 0.0
          %1187 = vmatprep.subr.mxu0 0.0
          %1188 = vmatpush1.msra.mxu0 0.0
          %1189 = vmatprep.subr.mxu0 0.0
          %1190 = vmatpush1.msra.mxu0 0.0
          %1191 = vmatprep.subr.mxu0 0.0
          %1192 = vmatpush1.msra.mxu0 0.0
          %1193 = vmatprep.subr.mxu0 0.0
          %1194 = vmatpush1.msra.mxu0 0.0
          %1195 = vmatprep.subr.mxu0 0.0
          %1196 = vmatpush1.msra.mxu0 0.0
          %1197 = vmatprep.subr.mxu0 0.0
          %1198 = vmatpush1.msra.mxu0 0.0
          %1199 = vmatprep.subr.mxu0 0.0
          %1200 = vmatpush1.msra.mxu0 0.0
          %1201 = vmatprep.subr.mxu0 0.0
          %1202 = vmatpush1.msra.mxu0 0.0
          %1203 = vmatprep.subr.mxu0 0.0
          %1204 = vmatpush1.msra.mxu0 0.0
          %1205 = vmatprep.subr.mxu0 0.0
          %1206 = vmatpush1.msra.mxu0 0.0
          %1207 = vmatprep.subr.mxu0 0.0
          %1208 = vmatpush1.msra.mxu0 %v1182
          %1209 = vmatprep.subr.mxu0 0.0
          %1210 = vmatpush1.msra.mxu0 %v1181
          %1211 = vmatprep.subr.mxu0 0.0
          %1212 = vmatpush1.msra.mxu0 %v1180
          %1213 = vmatprep.subr.mxu0 0.0
          %1214 = vmatpush1.msra.mxu0 %v1179
          %1215 = vmatprep.subr.mxu0 0.0
          %1216 = vmatpush2.msra.mxu0 0.0
          %1217 = vmatprep.subr.mxu0 0.0
          %1218 = vmatpush2.msra.mxu0 0.0
          %1219 = vmatprep.subr.mxu0 0.0
          %1220 = vmatpush2.msra.mxu0 0.0
          %1221 = vmatprep.subr.mxu0 0.0
          %1222 = vmatpush2.msra.mxu0 0.0
          %1223 = vmatprep.subr.mxu0 0.0
          %1224 = vmatpush2.msra.mxu0 0.0
          %1225 = vmatprep.subr.mxu0 0.0
          %1226 = vmatpush2.msra.mxu0 0.0
          %1227 = vmatprep.subr.mxu0 0.0
          %1228 = vmatpush2.msra.mxu0 0.0
          %1229 = vmatprep.subr.mxu0 0.0
          %1230 = vmatpush2.msra.mxu0 0.0
          %1231 = vmatprep.subr.mxu0 0.0
          %1232 = vmatpush2.msra.mxu0 0.0
          %1233 = vmatprep.subr.mxu0 0.0
          %1234 = vmatpush2.msra.mxu0 0.0
          %1235 = vmatprep.subr.mxu0 0.0
          %1236 = vmatpush2.msra.mxu0 0.0
          %1237 = vmatprep.subr.mxu0 0.0
          %1238 = vmatpush2.msra.mxu0 0.0
          %1239 = vmatprep.subr.mxu0 0.0
          %1240 = vmatpush2.msra.mxu0 0.0
          %1241 = vmatprep.subr.mxu0 0.0
          %1242 = vmatpush2.msra.mxu0 0.0
          %1243 = vmatprep.subr.mxu0 0.0
          %1244 = vmatpush2.msra.mxu0 0.0
          %1245 = vmatprep.subr.mxu0 0.0
          %1246 = vmatpush2.msra.mxu0 0.0
          %1247 = vmatprep.mubr.f32.mxu0 0.0
          %1248 = vmatmul.mubr.f32.gmra.mxu0 %v685
          %v1249 = vpop.f32.mrf.mxu0
          %v1250 = vadd.f32 0.0, %v1249
          %v1251 = vpop.f32.mrf.mxu0
          %1252 = vmatprep.mubr.f32.mxu0 0.0
          %1253 = vmatmul.mubr.f32.gmra.mxu0 %v688
          %v1254 = vpop.f32.mrf.mxu0
          %v1255 = vadd.f32 0.0, %v1254
          %v1256 = vpop.f32.mrf.mxu0
          %1257 = vdwg.mxu0
          %1258 = vst.msk [vmem:[#allocation5 + $0x60] sm:$0xff] %vm765, %v1250
          %1259 = vst.msk [vmem:[#allocation5 + $0x68] sm:$0xff] %vm765, %v1255
          %v1260 = vld [vmem:[%s2] sm:$0xff]
          %v1261 = vld [vmem:[%s2 + $0x8] sm:$0xff]
          %v1262 = vld [vmem:[#allocation5] sm:$0xff]
          %v1263 = vld [vmem:[#allocation5 + $0x8] sm:$0xff]
          %v1264 = vld [vmem:[#allocation5 + $0x10] sm:$0xff]
          %v1265 = vld [vmem:[#allocation5 + $0x18] sm:$0xff]
          %v1266 = vld [vmem:[#allocation5 + $0x20] sm:$0xff]
          %v1267 = vld [vmem:[#allocation5 + $0x28] sm:$0xff]
          %v1268 = vld [vmem:[#allocation5 + $0x30] sm:$0xff]
          %v1269 = vld [vmem:[#allocation5 + $0x38] sm:$0xff]
          %v1270 = vld [vmem:[#allocation5 + $0x40] sm:$0xff]
          %v1271 = vld [vmem:[#allocation5 + $0x48] sm:$0xff]
          %v1272 = vld [vmem:[#allocation5 + $0x50] sm:$0xff]
          %v1273 = vld [vmem:[#allocation5 + $0x58] sm:$0xff]
          %v1274 = vld [vmem:[#allocation5 + $0x60] sm:$0xff]
          %v1275 = vld [vmem:[#allocation5 + $0x68] sm:$0xff]
          %s1276 = sld [smem:[#allocation6]]
          %v1277 = vstv %s1276
          %vm1278 = vcmask 916480
          %v1280 = vsel %vm1278, %v1260, 0
          %v1283 = vsel %vm1278, %v1261, 0
          %1285 = vmatprep.subr.mxu0 0.0
          %1286 = vmatpush1.msra.mxu0 0.0
          %1287 = vmatprep.subr.mxu0 0.0
          %1288 = vmatpush1.msra.mxu0 0.0
          %1289 = vmatprep.subr.mxu0 0.0
          %1290 = vmatpush1.msra.mxu0 %v1275
          %1291 = vmatprep.subr.mxu0 0.0
          %1292 = vmatpush1.msra.mxu0 %v1274
          %1293 = vmatprep.subr.mxu0 0.0
          %1294 = vmatpush1.msra.mxu0 %v1273
          %1295 = vmatprep.subr.mxu0 0.0
          %1296 = vmatpush1.msra.mxu0 %v1272
          %1297 = vmatprep.subr.mxu0 0.0
          %1298 = vmatpush1.msra.mxu0 %v1271
          %1299 = vmatprep.subr.mxu0 0.0
          %1300 = vmatpush1.msra.mxu0 %v1270
          %1301 = vmatprep.subr.mxu0 0.0
          %1302 = vmatpush1.msra.mxu0 %v1269
          %1303 = vmatprep.subr.mxu0 0.0
          %1304 = vmatpush1.msra.mxu0 %v1268
          %1305 = vmatprep.subr.mxu0 0.0
          %1306 = vmatpush1.msra.mxu0 %v1267
          %1307 = vmatprep.subr.mxu0 0.0
          %1308 = vmatpush1.msra.mxu0 %v1266
          %1309 = vmatprep.subr.mxu0 0.0
          %1310 = vmatpush1.msra.mxu0 %v1265
          %1311 = vmatprep.subr.mxu0 0.0
          %1312 = vmatpush1.msra.mxu0 %v1264
          %1313 = vmatprep.subr.mxu0 0.0
          %1314 = vmatpush1.msra.mxu0 %v1263
          %1315 = vmatprep.subr.mxu0 0.0
          %1316 = vmatpush1.msra.mxu0 %v1262
          %1317 = vmatprep.subr.mxu0 0.0
          %1318 = vmatpush2.msra.mxu0 0.0
          %1319 = vmatprep.subr.mxu0 0.0
          %1320 = vmatpush2.msra.mxu0 0.0
          %1321 = vmatprep.subr.mxu0 0.0
          %1322 = vmatpush2.msra.mxu0 0.0
          %1323 = vmatprep.subr.mxu0 0.0
          %1324 = vmatpush2.msra.mxu0 0.0
          %1325 = vmatprep.subr.mxu0 0.0
          %1326 = vmatpush2.msra.mxu0 0.0
          %1327 = vmatprep.subr.mxu0 0.0
          %1328 = vmatpush2.msra.mxu0 0.0
          %1329 = vmatprep.subr.mxu0 0.0
          %1330 = vmatpush2.msra.mxu0 0.0
          %1331 = vmatprep.subr.mxu0 0.0
          %1332 = vmatpush2.msra.mxu0 0.0
          %1333 = vmatprep.subr.mxu0 0.0
          %1334 = vmatpush2.msra.mxu0 0.0
          %1335 = vmatprep.subr.mxu0 0.0
          %1336 = vmatpush2.msra.mxu0 0.0
          %1337 = vmatprep.subr.mxu0 0.0
          %1338 = vmatpush2.msra.mxu0 0.0
          %1339 = vmatprep.subr.mxu0 0.0
          %1340 = vmatpush2.msra.mxu0 0.0
          %1341 = vmatprep.subr.mxu0 0.0
          %1342 = vmatpush2.msra.mxu0 0.0
          %1343 = vmatprep.subr.mxu0 0.0
          %1344 = vmatpush2.msra.mxu0 0.0
          %1345 = vmatprep.subr.mxu0 0.0
          %1346 = vmatpush2.msra.mxu0 0.0
          %1347 = vmatprep.subr.mxu0 0.0
          %1348 = vmatpush2.msra.mxu0 0.0
          %1349 = vmatprep.mubr.f32.mxu0 0.0
          %1350 = vmatmul.mubr.f32.gmra.mxu0 %v1280
          %v1351 = vpop.f32.mrf.mxu0
          %v1352 = vadd.f32 %v1277, %v1351
          %v1353 = vpop.f32.mrf.mxu0
          %1354 = vmatprep.mubr.f32.mxu0 0.0
          %1355 = vmatmul.mubr.f32.gmra.mxu0 %v1283
          %v1356 = vpop.f32.mrf.mxu0
          %v1357 = vadd.f32 %v1277, %v1356
          %v1358 = vpop.f32.mrf.mxu0
          %1359 = vdwg.mxu0
          %v1360 = vsub.f32 0.0, %v1352
          %v1361 = vsub.f32 0.0, %v1357
          %v1362 = vmul.f32 %v1360, 1.442695
          %v1363 = vpow.pop %v1362
          %v1364 = vmul.f32 %v1361, 1.442695
          %v1365 = vpow.pop %v1364
          %v1366 = vadd.f32 %v1363, 1.0
          %v1367 = vadd.f32 %v1365, 1.0
          %v1368 = vrcp.pop %v1366
          %v1369 = vrcp.pop %v1367
          %v1370 = vlaneseq
          %vm1371 = vcmp.ge.s32.totalorder %v1370, 0
          %vm1372 = vcmp.lt.s32.totalorder %v1370, 16
          %vm1373 = vmand %vm1371, %vm1372
          %1374 = vst.msk [vmem:[%s216] sm:$0x1] %vm1373, %v1368
          %v1377 = vunpack.c.l.s4 1966171168
          %v1378 = vunpack.c.0.s8 %v1377
          %v1379 = vlaneseq
          %v1380 = vshrl.u32 %v1379, 7
          %v1381 = vsub.s32 %v1378, %v1380
          %v1382 = vrot.slane %v1368, %v1381
          %v1383 = vcombine.high %v1382, %v1382
          %v1385 = vunpack.c.l.s4 1966171168
          %v1386 = vunpack.c.0.s8 %v1385
          %v1387 = vlaneseq
          %v1388 = vshrl.u32 %v1387, 7
          %v1389 = vsub.s32 %v1386, %v1388
          %v1390 = vrot.slane %v1382, %v1389
          %v1392 = vunpack.c.l.s4 1966171168
          %v1393 = vunpack.c.0.s8 %v1392
          %v1394 = vlaneseq
          %v1395 = vshrl.u32 %v1394, 7
          %v1396 = vsub.s32 %v1393, %v1395
          %v1397 = vrot.slane %v1383, %v1396
          %1398 = vrot.lane.b32.xlu0 %v1397, 16
          %v1399 = vpop.permute.xlu0 %1398
          %vm1401 = vcmp.ge.s32.totalorder %v1370, 16
          %vm1402 = vcmp.lt.s32.totalorder %v1370, 32
          %vm1403 = vmand %vm1401, %vm1402
          %1404 = vst.msk [vmem:[%s216] sm:$0x1] %vm1403, %v1399
          %v1405 = vcombine.high %v1390, %v1390
          %1406 = vrot.lane.b32.xlu0 %v1405, 32
          %v1407 = vpop.permute.xlu0 %1406
          %vm1409 = vcmp.ge.s32.totalorder %v1370, 32
          %vm1410 = vcmp.lt.s32.totalorder %v1370, 48
          %vm1411 = vmand %vm1409, %vm1410
          %1412 = vst.msk [vmem:[%s216] sm:$0x1] %vm1411, %v1407
          %v1413 = vcombine.high %v1397, %v1397
          %1414 = vrot.lane.b32.xlu0 %v1413, 48
          %v1415 = vpop.permute.xlu0 %1414
          %vm1417 = vcmp.ge.s32.totalorder %v1370, 48
          %vm1418 = vcmp.lt.s32.totalorder %v1370, 64
          %vm1419 = vmand %vm1417, %vm1418
          %1420 = vst.msk [vmem:[%s216] sm:$0x1] %vm1419, %v1415
          %v1421 = vcombine.high %v1368, %v1368
          %v1423 = vunpack.c.l.s4 1966171168
          %v1424 = vunpack.c.0.s8 %v1423
          %v1425 = vlaneseq
          %v1426 = vshrl.u32 %v1425, 7
          %v1427 = vsub.s32 %v1424, %v1426
          %v1428 = vrot.slane %v1421, %v1427
          %v1430 = vunpack.c.l.s4 1966171168
          %v1431 = vunpack.c.0.s8 %v1430
          %v1432 = vlaneseq
          %v1433 = vshrl.u32 %v1432, 7
          %v1434 = vsub.s32 %v1431, %v1433
          %v1435 = vrot.slane %v1428, %v1434
          %1436 = vrot.lane.b32.xlu0 %v1435, 64
          %v1437 = vpop.permute.xlu0 %1436
          %vm1439 = vcmp.ge.s32.totalorder %v1370, 64
          %vm1440 = vcmp.lt.s32.totalorder %v1370, 80
          %vm1441 = vmand %vm1439, %vm1440
          %1442 = vst.msk [vmem:[%s216] sm:$0x1] %vm1441, %v1437
          %v1443 = vcombine.high %v1428, %v1428
          %v1445 = vunpack.c.l.s4 1966171168
          %v1446 = vunpack.c.0.s8 %v1445
          %v1447 = vlaneseq
          %v1448 = vshrl.u32 %v1447, 7
          %v1449 = vsub.s32 %v1446, %v1448
          %v1450 = vrot.slane %v1443, %v1449
          %1451 = vrot.lane.b32.xlu0 %v1450, 80
          %v1452 = vpop.permute.xlu0 %1451
          %vm1454 = vcmp.ge.s32.totalorder %v1370, 80
          %vm1455 = vcmp.lt.s32.totalorder %v1370, 96
          %vm1456 = vmand %vm1454, %vm1455
          %1457 = vst.msk [vmem:[%s216] sm:$0x1] %vm1456, %v1452
          %v1458 = vcombine.high %v1435, %v1435
          %1459 = vrot.lane.b32.xlu0 %v1458, 96
          %v1460 = vpop.permute.xlu0 %1459
          %vm1462 = vcmp.ge.s32.totalorder %v1370, 96
          %vm1463 = vcmp.lt.s32.totalorder %v1370, 112
          %vm1464 = vmand %vm1462, %vm1463
          %1465 = vst.msk [vmem:[%s216] sm:$0x1] %vm1464, %v1460
          %v1466 = vcombine.high %v1450, %v1450
          %1467 = vrot.lane.b32.xlu0 %v1466, 112
          %v1468 = vpop.permute.xlu0 %1467
          %vm1470 = vcmp.ge.s32.totalorder %v1370, 112
          %vm1471 = vcmp.lt.s32.totalorder %v1370, 128
          %vm1472 = vmand %vm1470, %vm1471
          %1473 = vst.msk [vmem:[%s216] sm:$0x1] %vm1472, %v1468
          %1474 = vst.msk [vmem:[%s216 + $0x1] sm:$0x1] %vm1373, %v1369
          %v1477 = vunpack.c.l.s4 1966171168
          %v1478 = vunpack.c.0.s8 %v1477
          %v1479 = vlaneseq
          %v1480 = vshrl.u32 %v1479, 7
          %v1481 = vsub.s32 %v1478, %v1480
          %v1482 = vrot.slane %v1369, %v1481
          %v1483 = vcombine.high %v1482, %v1482
          %v1485 = vunpack.c.l.s4 1966171168
          %v1486 = vunpack.c.0.s8 %v1485
          %v1487 = vlaneseq
          %v1488 = vshrl.u32 %v1487, 7
          %v1489 = vsub.s32 %v1486, %v1488
          %v1490 = vrot.slane %v1482, %v1489
          %v1492 = vunpack.c.l.s4 1966171168
          %v1493 = vunpack.c.0.s8 %v1492
          %v1494 = vlaneseq
          %v1495 = vshrl.u32 %v1494, 7
          %v1496 = vsub.s32 %v1493, %v1495
          %v1497 = vrot.slane %v1483, %v1496
          %1498 = vrot.lane.b32.xlu0 %v1497, 16
          %v1499 = vpop.permute.xlu0 %1498
          %1501 = vst.msk [vmem:[%s216 + $0x1] sm:$0x1] %vm1403, %v1499
          %v1502 = vcombine.high %v1490, %v1490
          %1503 = vrot.lane.b32.xlu0 %v1502, 32
          %v1504 = vpop.permute.xlu0 %1503
          %1506 = vst.msk [vmem:[%s216 + $0x1] sm:$0x1] %vm1411, %v1504
          %v1507 = vcombine.high %v1497, %v1497
          %1508 = vrot.lane.b32.xlu0 %v1507, 48
          %v1509 = vpop.permute.xlu0 %1508
          %1511 = vst.msk [vmem:[%s216 + $0x1] sm:$0x1] %vm1419, %v1509
          %v1512 = vcombine.high %v1369, %v1369
          %v1514 = vunpack.c.l.s4 1966171168
          %v1515 = vunpack.c.0.s8 %v1514
          %v1516 = vlaneseq
          %v1517 = vshrl.u32 %v1516, 7
          %v1518 = vsub.s32 %v1515, %v1517
          %v1519 = vrot.slane %v1512, %v1518
          %v1521 = vunpack.c.l.s4 1966171168
          %v1522 = vunpack.c.0.s8 %v1521
          %v1523 = vlaneseq
          %v1524 = vshrl.u32 %v1523, 7
          %v1525 = vsub.s32 %v1522, %v1524
          %v1526 = vrot.slane %v1519, %v1525
          %1527 = vrot.lane.b32.xlu0 %v1526, 64
          %v1528 = vpop.permute.xlu0 %1527
          %1530 = vst.msk [vmem:[%s216 + $0x1] sm:$0x1] %vm1441, %v1528
          %v1531 = vcombine.high %v1519, %v1519
          %v1533 = vunpack.c.l.s4 1966171168
          %v1534 = vunpack.c.0.s8 %v1533
          %v1535 = vlaneseq
          %v1536 = vshrl.u32 %v1535, 7
          %v1537 = vsub.s32 %v1534, %v1536
          %v1538 = vrot.slane %v1531, %v1537
          %1539 = vrot.lane.b32.xlu0 %v1538, 80
          %v1540 = vpop.permute.xlu0 %1539
          %1542 = vst.msk [vmem:[%s216 + $0x1] sm:$0x1] %vm1456, %v1540
          %v1543 = vcombine.high %v1526, %v1526
          %1544 = vrot.lane.b32.xlu0 %v1543, 96
          %v1545 = vpop.permute.xlu0 %1544
          %1547 = vst.msk [vmem:[%s216 + $0x1] sm:$0x1] %vm1464, %v1545
          %v1548 = vcombine.high %v1538, %v1538
          %1549 = vrot.lane.b32.xlu0 %v1548, 112
          %v1550 = vpop.permute.xlu0 %1549
          %1552 = vst.msk [vmem:[%s216 + $0x1] sm:$0x1] %vm1472, %v1550
        $region48: #{tpu_custom_call.1} parent=35 // pred_fallthru
          _
        %s1553 = sand.u32 %s130, 1
        %s1554 = scalar_lea.sflag [#allocation8], %s1553
        %s1555 = sand.u32 %s130, 1
        %s1556 = smul.addr %s1555, 2
        %s1557 = scalar_lea.vmem [#allocation7], %s1556
        // Predicated region
        $region49: #{tpu_custom_call.1} parent=35 // pred_check
          %p1558 = pneg %p140
        $region50: #{tpu_custom_call.1} parent=35 // pred_check_branch
          %1560 = sbr.rel (%p1558) target = $region52
        $region51: #{tpu_custom_call.1} parent=35 // pred_region
          %s1562 = ssub.s32 32, 32
          %1563 = vsyncadd %s1554, %s1562
          %s1564 = smul.addr %s23, 2
          %s1565 = smul.addr %s1564, 16
          %s1566 = scalar_lea.hbm %s4, %s1565
          %s1568 = sshll.u32 %s1557, 4
          %s1569 = int_to_ptr.vmem [resolvable:$true] %s1568
          %1571 = dma.vmem_to_hbm [thread:$0]  %s1569, 32, %s1566, %s1554
        $region52: #{tpu_custom_call.1} parent=35 // pred_fallthru
          _
      $region36: #{tpu_custom_call.1} parent=5 // pred_fallthru
        _
      %p1572 = scmp.le.s32.totalorder 2, %s14
      // Predicated region
      $region53: #{tpu_custom_call.1} parent=5 // pred_check
        %p1573 = pneg %p1572
      $region54: #{tpu_custom_call.1} parent=5 // pred_check_branch
        %1575 = sbr.rel (%p1573) target = $region56
      $region55: #{tpu_custom_call.1} parent=5 // pred_region
        %s1576 = ssub.s32 %s14, 2
        // Predicated region
        $region57: #{tpu_custom_call.1} parent=55 // pred_check
          %p1577 = pneg %p146
        $region58: #{tpu_custom_call.1} parent=55 // pred_check_branch
          %1579 = sbr.rel (%p1577) target = $region60
        $region59: #{tpu_custom_call.1} parent=55 // pred_region
          %s1580 = sand.u32 %s131, 1
          %s1581 = scalar_lea.sflag [#allocation8], %s1580
          %s1582 = sand.u32 %s131, 1
          %s1583 = smul.addr %s1582, 2
          %s1584 = scalar_lea.vmem [#allocation7], %s1583
          %1585 = dma.done %s1581, 32
        $region60: #{tpu_custom_call.1} parent=55 // pred_fallthru
          _
      $region56: #{tpu_custom_call.1} parent=5 // pred_fallthru
        _
    $region6: #{tpu_custom_call.1} parent=1 // loop_footer
      %s18 = sadd.s32 1, %s14
    $region7: #{tpu_custom_call.1} parent=1 // loop_footer_branch
      %13 = sbr.rel target = $region3
    $region8: #{tpu_custom_call.1} parent=1 // loop_exit
      _
    %1586 = vsyncpa [#allocation8], 1
    %s1587 = scalar_lea.sflag [#allocation8], 1
    %1588 = vsyncpa %s1587, 1

</llo_original>
